<compile_context>
chip_gen: v6e
topology: v6e:2x2x1
jax: 0.10.0
libtpu: 0.0.40
codegen_flags: <defaults>
</compile_context>

<pallas_src>
import functools
import math

import jax
import jax.numpy as jnp
from jax import lax
from jax.experimental import pallas as pl
from jax.experimental.pallas import tpu as pltpu


def _self_attention_kernel(x_ref, wqkv_ref, bqkv_ref, wp_ref, bp_ref, o_ref,
                           y_ref, *, n_head, block_b, seq_len):
    """One block of `block_b` batch elements per grid step.

    x_ref    : (block_b*T, C) bf16  — batches stacked along rows
    wqkv_ref : (C, 3C) bf16         — pre-transposed, columns = [Wq.T|Wk.T|Wv.T]
    bqkv_ref : (1, 3C) f32          — fused bias [bq | bk | bv]
    wp_ref   : (C, C)  bf16         — pre-transposed output projection (in, out)
    bp_ref   : (1, C)  f32
    o_ref    : (block_b*T, C) bf16
    y_ref    : (block_b*T, C) bf16 VMEM scratch — packed per-head attn outputs
    """
    T = seq_len
    _, C = x_ref.shape
    D = C // n_head
    scale = 1.0 / math.sqrt(D)

    # Fused QKV projection over all block_b*T rows: one wide MXU matmul
    # (bf16 operands, f32 accumulation), f32 bias add, then ONE full-width
    # cast of the whole slab back to bf16 (per-head q/k/v slices reuse it).
    qkv = jnp.dot(x_ref[...], wqkv_ref[...], preferred_element_type=jnp.float32)
    qkv = (qkv + bqkv_ref[...]).astype(jnp.bfloat16)          # (block_b*T, 3C)

    # Attention core per (batch, head). Each head's (T, D) output goes into its
    # lane slice of the y scratch slab so the output projection afterwards is a
    # single matmul with full K = C contraction depth.
    # NOTE: static Python loops are fine at these tiny trip counts; switch to
    # lax.fori_loop(..., unroll=True) if T or n_head grows (vreg live ranges).
    for b in range(block_b):
        r0 = b * T
        for h in range(n_head):
            c0 = h * D
            q_bh = qkv[r0:r0 + T, c0:c0 + D]                       # (T, D) bf16
            k_bh = qkv[r0:r0 + T, C + c0:C + c0 + D]               # (T, D) bf16
            v_bh = qkv[r0:r0 + T, 2 * C + c0:2 * C + c0 + D]       # (T, D) bf16

            # Scores: contract last dims directly (no k^T materialization).
            att = lax.dot_general(
                q_bh, k_bh, (((1,), (1,)), ((), ())),
                preferred_element_type=jnp.float32) * scale        # (T, T) f32

            # Numerically stable softmax in f32; reciprocal uses the EUP slot.
            att = att - jnp.max(att, axis=-1, keepdims=True)
            att = jnp.exp(att)
            att = att * pl.reciprocal(jnp.sum(att, axis=-1, keepdims=True),
                                      approx=True)
            # TODO(synk): attn_drop (Dropout) skipped — inference / pdrop = 0.
            # TODO(synk): for long T switch to a flash-style KV-streamed
            # softmax (extra 'arbitrary' grid axis, running m/l/acc scratch)
            # instead of materializing the full (T,T) score tile.

            y_bh = jnp.dot(att.astype(jnp.bfloat16), v_bh,
                           preferred_element_type=jnp.float32)     # (T, D) f32
            y_ref[r0:r0 + T, c0:c0 + D] = y_bh.astype(jnp.bfloat16)

    # Single fused output projection (one MXU call, K = C) + bias.
    # resid_drop skipped (identity).
    out = jnp.dot(y_ref[...], wp_ref[...], preferred_element_type=jnp.float32)
    o_ref[...] = (out + bp_ref[...]).astype(o_ref.dtype)


def self_attention(x, params, n_head, *, batch_block=None):
    """x: (B, T, C) float32. params: nn.Linear-style dict (W:(C,C), b:(1,C))."""
    B, T, C = x.shape
    assert C % n_head == 0

    if batch_block is None:
        # Amortize per-grid-step overhead across several batch elements while
        # keeping >= 2 grid steps so both v7x TensorCores get work.
        batch_block = max(1, B // 2)
    assert B % batch_block == 0
    num_blocks = B // batch_block
    rows = batch_block * T

    # Wrapper-side layout plumbing (done once by XLA, free for the kernel):
    # pre-transpose to (in, out), fuse Q/K/V, cast MXU operands to bf16, and
    # flatten (B, T, C) -> (B*T, C) so the kernel never reshapes.
    wqkv_t = jnp.concatenate(
        [params["wq"].T, params["wk"].T, params["wv"].T], axis=1
    ).astype(jnp.bfloat16)                                     # (C, 3C)
    bqkv = jnp.concatenate(
        [params["bq"], params["bk"], params["bv"]], axis=1
    ).astype(jnp.float32)                                      # (1, 3C)
    wp_t = params["wp"].T.astype(jnp.bfloat16)                 # (C, C)
    bp = params["bp"].astype(jnp.float32)                      # (1, C)
    x2d = x.astype(jnp.bfloat16).reshape(B * T, C)

    kernel = functools.partial(_self_attention_kernel, n_head=n_head,
                               block_b=batch_block, seq_len=T)

    flops = B * (8 * T * C * C + 4 * T * T * C)
    transcendentals = B * n_head * T * T
    bytes_accessed = (B * T * C * 2          # x (bf16 in)
                      + B * T * C * 2        # out (bf16)
                      + 4 * C * C * 2        # fused Wqkv + Wp (bf16)
                      + 4 * C * 4)           # biases (f32)

    out2d = pl.pallas_call(
        kernel,
        out_shape=jax.ShapeDtypeStruct((B * T, C), jnp.bfloat16),
        grid_spec=pltpu.PrefetchScalarGridSpec(
            num_scalar_prefetch=0,
            grid=(num_blocks,),
            in_specs=[
                pl.BlockSpec((rows, C), lambda i: (i, 0)),       # x rows
                # TODO(synk): at production C, single-buffer the resident
                # weights (pipeline_mode=pl.Buffered(1)) or tile K with a
                # reduction grid axis — double-buffered fused Wqkv is
                # 12*C^2 bytes and would blow v7x's 64 MiB VMEM for large C.
                # Moot at C = 128 (<1 MiB total).
                pl.BlockSpec((C, 3 * C), lambda i: (0, 0)),      # fused Wqkv^T
                pl.BlockSpec((1, 3 * C), lambda i: (0, 0)),      # fused bias
                pl.BlockSpec((C, C), lambda i: (0, 0)),          # Wp^T
                pl.BlockSpec((1, C), lambda i: (0, 0)),          # bp
            ],
            out_specs=pl.BlockSpec((rows, C), lambda i: (i, 0)),
            scratch_shapes=[pltpu.VMEM((rows, C), jnp.bfloat16)],
        ),
        compiler_params=pltpu.CompilerParams(
            dimension_semantics=("parallel",),
        ),
        cost_estimate=pl.CostEstimate(
            flops=flops,
            transcendentals=transcendentals,
            bytes_accessed=bytes_accessed,
        ),
    )(x2d, wqkv_t, bqkv, wp_t, bp)

    return out2d.reshape(B, T, C)


def init_params(key, n_embd):
    """Deterministic synthetic init (PyTorch nn.Linear-like uniform)."""
    ks = jax.random.split(key, 8)
    bound = 1.0 / math.sqrt(n_embd)
    u = lambda k, shape: jax.random.uniform(k, shape, jnp.float32, -bound, bound)
    return {
        "wq": u(ks[0], (n_embd, n_embd)), "bq": u(ks[1], (1, n_embd)),
        "wk": u(ks[2], (n_embd, n_embd)), "bk": u(ks[3], (1, n_embd)),
        "wv": u(ks[4], (n_embd, n_embd)), "bv": u(ks[5], (1, n_embd)),
        "wp": u(ks[6], (n_embd, n_embd)), "bp": u(ks[7], (1, n_embd)),
    }


def reference_self_attention(x, params, n_head):
    """Pure-JAX f32 reference mirroring the PyTorch forward (dropout = identity)."""
    B, T, C = x.shape
    D = C // n_head
    lin = lambda x, w, b: jnp.einsum("btc,oc->bto", x, w) + b[0]
    q = lin(x, params["wq"], params["bq"]).reshape(B, T, n_head, D).transpose(0, 2, 1, 3)
    k = lin(x, params["wk"], params["bk"]).reshape(B, T, n_head, D).transpose(0, 2, 1, 3)
    v = lin(x, params["wv"], params["bv"]).reshape(B, T, n_head, D).transpose(0, 2, 1, 3)
    att = jnp.einsum("bhtd,bhsd->bhts", q, k) / math.sqrt(D)
    att = jax.nn.softmax(att, axis=-1)
    y = jnp.einsum("bhts,bhsd->bhtd", att, v)
    y = y.transpose(0, 2, 1, 3).reshape(B, T, C)
    return lin(y, params["wp"], params["bp"])


if __name__ == "__main__":
    # Small but TPU-friendly shapes: C = 128 keeps every tile lane-dense,
    # T = 16 is sublane-aligned, head_dim = 32.  B = 4 with batch_block = 2
    # gives a 2-step 'parallel' grid (both v7x TensorCores busy) while each
    # step still projects 32 rows at once.
    B, T, C, n_head = 4, 16, 128, 4

    key = jax.random.PRNGKey(0)
    kx, kp = jax.random.split(key)
    x = jax.random.normal(kx, (B, T, C), jnp.float32)
    params = init_params(kp, C)

    out = self_attention(x, params, n_head)
    out = jax.block_until_ready(out)

    ref = reference_self_attention(x, params, n_head)
    assert out.shape == (B, T, C)
    out_f32 = out.astype(jnp.float32)
    max_err = jnp.max(jnp.abs(out_f32 - ref))
    # bf16 MXU operands + bf16 output vs a pure-f32 reference -> loosened tol.
    assert jnp.allclose(out_f32, ref, atol=5e-2, rtol=5e-2), f"max abs err {max_err}"

    print("KERNEL_OK")
</pallas_src>

<mosaic_0001>
module attributes {stable_mosaic.version = 11 : i64} {
  func.func @_self_attention_kernel(%arg0: i32, %arg1: memref<32x128xbf16, #tpu.memory_space<vmem>>, %arg2: memref<128x384xbf16, #tpu.memory_space<vmem>>, %arg3: memref<1x384xf32, #tpu.memory_space<vmem>>, %arg4: memref<128x128xbf16, #tpu.memory_space<vmem>>, %arg5: memref<1x128xf32, #tpu.memory_space<vmem>>, %arg6: memref<32x128xbf16, #tpu.memory_space<vmem>>, %arg7: memref<32x128xbf16, #tpu.memory_space<vmem>>) attributes {dimension_semantics = [#tpu.dimension_semantics<parallel>], iteration_bounds = array<i64: 2>, scalar_prefetch = 0 : i64, scratch_operands = 1 : i64, tpu.core_type = #tpu.core_type<tc>, window_params = [{transform_indices = @transform_0, window_bounds = array<i64: 32, 128>}, {pipeline_mode = #tpu.pipeline_mode<synchronous>, transform_indices = @transform_1, window_bounds = array<i64: 128, 384>}, {pipeline_mode = #tpu.pipeline_mode<synchronous>, transform_indices = @transform_2, window_bounds = array<i64: 1, 384>}, {pipeline_mode = #tpu.pipeline_mode<synchronous>, transform_indices = @transform_3, window_bounds = array<i64: 128, 128>}, {pipeline_mode = #tpu.pipeline_mode<synchronous>, transform_indices = @transform_4, window_bounds = array<i64: 1, 128>}, {transform_indices = @transform_5, window_bounds = array<i64: 32, 128>}]} {
    %c0 = arith.constant 0 : index
    %c0_0 = arith.constant 0 : index
    %0 = vector.load %arg1[%c0, %c0_0] : memref<32x128xbf16, #tpu.memory_space<vmem>>, vector<32x128xbf16>
    %c0_1 = arith.constant 0 : index
    %c0_2 = arith.constant 0 : index
    %1 = vector.load %arg2[%c0_1, %c0_2] : memref<128x384xbf16, #tpu.memory_space<vmem>>, vector<128x384xbf16>
    %cst = arith.constant dense<0.000000e+00> : vector<32x384xf32>
    %2 = tpu.matmul %0, %1, %cst {dimension_numbers = #tpu.dot_dimension_numbers<[1], [0], [0], [1], [0, 0, 1, 1], [], []>} : vector<32x128xbf16>, vector<128x384xbf16>, vector<32x384xf32> -> vector<32x384xf32>
    %c0_3 = arith.constant 0 : index
    %c0_4 = arith.constant 0 : index
    %3 = vector.load %arg3[%c0_3, %c0_4] : memref<1x384xf32, #tpu.memory_space<vmem>>, vector<1x384xf32>
    %4 = vector.broadcast %3 : vector<1x384xf32> to vector<32x384xf32>
    %5 = arith.addf %2, %4 : vector<32x384xf32>
    %6 = arith.truncf %5 : vector<32x384xf32> to vector<32x384xbf16>
    %7 = vector.extract_strided_slice %6 {offsets = [0, 0], sizes = [16, 32], strides = [1, 1]} : vector<32x384xbf16> to vector<16x32xbf16>
    %8 = vector.extract_strided_slice %6 {offsets = [0, 128], sizes = [16, 32], strides = [1, 1]} : vector<32x384xbf16> to vector<16x32xbf16>
    %9 = vector.extract_strided_slice %6 {offsets = [0, 256], sizes = [16, 32], strides = [1, 1]} : vector<32x384xbf16> to vector<16x32xbf16>
    %cst_5 = arith.constant dense<0.000000e+00> : vector<16x16xf32>
    %10 = tpu.matmul %7, %8, %cst_5 {dimension_numbers = #tpu.dot_dimension_numbers<[1], [1], [0], [0], [0, 0, 1, 0], [], []>} : vector<16x32xbf16>, vector<16x32xbf16>, vector<16x16xf32> -> vector<16x16xf32>
    %cst_6 = arith.constant 0.176776692 : f32
    %11 = vector.broadcast %cst_6 : f32 to vector<16x16xf32>
    %12 = arith.mulf %10, %11 : vector<16x16xf32>
    %cst_7 = arith.constant dense<0xFF800000> : vector<16xf32>
    %13 = vector.multi_reduction <maximumf>, %12, %cst_7 [1] : vector<16x16xf32> to vector<16xf32>
    %14 = vector.shape_cast %13 : vector<16xf32> to vector<16x1xf32>
    %15 = vector.broadcast %14 : vector<16x1xf32> to vector<16x16xf32>
    %16 = arith.subf %12, %15 : vector<16x16xf32>
    %17 = math.exp %16 : vector<16x16xf32>
    %cst_8 = arith.constant dense<0.000000e+00> : vector<16xf32>
    %18 = vector.multi_reduction <add>, %17, %cst_8 [1] : vector<16x16xf32> to vector<16xf32>
    %19 = vector.shape_cast %18 : vector<16xf32> to vector<16x1xf32>
    %20 = tpu.reciprocal %19 {approx = true} : vector<16x1xf32> -> vector<16x1xf32>
    %21 = vector.broadcast %20 : vector<16x1xf32> to vector<16x16xf32>
    %22 = arith.mulf %17, %21 : vector<16x16xf32>
    %23 = arith.truncf %22 : vector<16x16xf32> to vector<16x16xbf16>
    %cst_9 = arith.constant dense<0.000000e+00> : vector<16x32xf32>
    %24 = tpu.matmul %23, %9, %cst_9 {dimension_numbers = #tpu.dot_dimension_numbers<[1], [0], [0], [1], [0, 0, 1, 1], [], []>} : vector<16x16xbf16>, vector<16x32xbf16>, vector<16x32xf32> -> vector<16x32xf32>
    %25 = arith.truncf %24 : vector<16x32xf32> to vector<16x32xbf16>
    %c0_10 = arith.constant 0 : index
    %c0_11 = arith.constant 0 : index
    %26 = vector.load %arg7[%c0_10, %c0_11] : memref<32x128xbf16, #tpu.memory_space<vmem>>, vector<16x32xbf16>
    tpu.vector_store %arg7[%c0_10, %c0_11], %25 {strides = array<i32>} : memref<32x128xbf16, #tpu.memory_space<vmem>>, vector<16x32xbf16>,
    %27 = vector.extract_strided_slice %6 {offsets = [0, 32], sizes = [16, 32], strides = [1, 1]} : vector<32x384xbf16> to vector<16x32xbf16>
    %28 = vector.extract_strided_slice %6 {offsets = [0, 160], sizes = [16, 32], strides = [1, 1]} : vector<32x384xbf16> to vector<16x32xbf16>
    %29 = vector.extract_strided_slice %6 {offsets = [0, 288], sizes = [16, 32], strides = [1, 1]} : vector<32x384xbf16> to vector<16x32xbf16>
    %cst_12 = arith.constant dense<0.000000e+00> : vector<16x16xf32>
    %30 = tpu.matmul %27, %28, %cst_12 {dimension_numbers = #tpu.dot_dimension_numbers<[1], [1], [0], [0], [0, 0, 1, 0], [], []>} : vector<16x32xbf16>, vector<16x32xbf16>, vector<16x16xf32> -> vector<16x16xf32>
    %cst_13 = arith.constant 0.176776692 : f32
    %31 = vector.broadcast %cst_13 : f32 to vector<16x16xf32>
    %32 = arith.mulf %30, %31 : vector<16x16xf32>
    %cst_14 = arith.constant dense<0xFF800000> : vector<16xf32>
    %33 = vector.multi_reduction <maximumf>, %32, %cst_14 [1] : vector<16x16xf32> to vector<16xf32>
    %34 = vector.shape_cast %33 : vector<16xf32> to vector<16x1xf32>
    %35 = vector.broadcast %34 : vector<16x1xf32> to vector<16x16xf32>
    %36 = arith.subf %32, %35 : vector<16x16xf32>
    %37 = math.exp %36 : vector<16x16xf32>
    %cst_15 = arith.constant dense<0.000000e+00> : vector<16xf32>
    %38 = vector.multi_reduction <add>, %37, %cst_15 [1] : vector<16x16xf32> to vector<16xf32>
    %39 = vector.shape_cast %38 : vector<16xf32> to vector<16x1xf32>
    %40 = tpu.reciprocal %39 {approx = true} : vector<16x1xf32> -> vector<16x1xf32>
    %41 = vector.broadcast %40 : vector<16x1xf32> to vector<16x16xf32>
    %42 = arith.mulf %37, %41 : vector<16x16xf32>
    %43 = arith.truncf %42 : vector<16x16xf32> to vector<16x16xbf16>
    %cst_16 = arith.constant dense<0.000000e+00> : vector<16x32xf32>
    %44 = tpu.matmul %43, %29, %cst_16 {dimension_numbers = #tpu.dot_dimension_numbers<[1], [0], [0], [1], [0, 0, 1, 1], [], []>} : vector<16x16xbf16>, vector<16x32xbf16>, vector<16x32xf32> -> vector<16x32xf32>
    %45 = arith.truncf %44 : vector<16x32xf32> to vector<16x32xbf16>
    %c0_17 = arith.constant 0 : index
    %c32 = arith.constant 32 : index
    %46 = vector.load %arg7[%c0_17, %c32] : memref<32x128xbf16, #tpu.memory_space<vmem>>, vector<16x32xbf16>
    tpu.vector_store %arg7[%c0_17, %c32], %45 {strides = array<i32>} : memref<32x128xbf16, #tpu.memory_space<vmem>>, vector<16x32xbf16>,
    %47 = vector.extract_strided_slice %6 {offsets = [0, 64], sizes = [16, 32], strides = [1, 1]} : vector<32x384xbf16> to vector<16x32xbf16>
    %48 = vector.extract_strided_slice %6 {offsets = [0, 192], sizes = [16, 32], strides = [1, 1]} : vector<32x384xbf16> to vector<16x32xbf16>
    %49 = vector.extract_strided_slice %6 {offsets = [0, 320], sizes = [16, 32], strides = [1, 1]} : vector<32x384xbf16> to vector<16x32xbf16>
    %cst_18 = arith.constant dense<0.000000e+00> : vector<16x16xf32>
    %50 = tpu.matmul %47, %48, %cst_18 {dimension_numbers = #tpu.dot_dimension_numbers<[1], [1], [0], [0], [0, 0, 1, 0], [], []>} : vector<16x32xbf16>, vector<16x32xbf16>, vector<16x16xf32> -> vector<16x16xf32>
    %cst_19 = arith.constant 0.176776692 : f32
    %51 = vector.broadcast %cst_19 : f32 to vector<16x16xf32>
    %52 = arith.mulf %50, %51 : vector<16x16xf32>
    %cst_20 = arith.constant dense<0xFF800000> : vector<16xf32>
    %53 = vector.multi_reduction <maximumf>, %52, %cst_20 [1] : vector<16x16xf32> to vector<16xf32>
    %54 = vector.shape_cast %53 : vector<16xf32> to vector<16x1xf32>
    %55 = vector.broadcast %54 : vector<16x1xf32> to vector<16x16xf32>
    %56 = arith.subf %52, %55 : vector<16x16xf32>
    %57 = math.exp %56 : vector<16x16xf32>
    %cst_21 = arith.constant dense<0.000000e+00> : vector<16xf32>
    %58 = vector.multi_reduction <add>, %57, %cst_21 [1] : vector<16x16xf32> to vector<16xf32>
    %59 = vector.shape_cast %58 : vector<16xf32> to vector<16x1xf32>
    %60 = tpu.reciprocal %59 {approx = true} : vector<16x1xf32> -> vector<16x1xf32>
    %61 = vector.broadcast %60 : vector<16x1xf32> to vector<16x16xf32>
    %62 = arith.mulf %57, %61 : vector<16x16xf32>
    %63 = arith.truncf %62 : vector<16x16xf32> to vector<16x16xbf16>
    %cst_22 = arith.constant dense<0.000000e+00> : vector<16x32xf32>
    %64 = tpu.matmul %63, %49, %cst_22 {dimension_numbers = #tpu.dot_dimension_numbers<[1], [0], [0], [1], [0, 0, 1, 1], [], []>} : vector<16x16xbf16>, vector<16x32xbf16>, vector<16x32xf32> -> vector<16x32xf32>
    %65 = arith.truncf %64 : vector<16x32xf32> to vector<16x32xbf16>
    %c0_23 = arith.constant 0 : index
    %c64 = arith.constant 64 : index
    %66 = vector.load %arg7[%c0_23, %c64] : memref<32x128xbf16, #tpu.memory_space<vmem>>, vector<16x32xbf16>
    tpu.vector_store %arg7[%c0_23, %c64], %65 {strides = array<i32>} : memref<32x128xbf16, #tpu.memory_space<vmem>>, vector<16x32xbf16>,
    %67 = vector.extract_strided_slice %6 {offsets = [0, 96], sizes = [16, 32], strides = [1, 1]} : vector<32x384xbf16> to vector<16x32xbf16>
    %68 = vector.extract_strided_slice %6 {offsets = [0, 224], sizes = [16, 32], strides = [1, 1]} : vector<32x384xbf16> to vector<16x32xbf16>
    %69 = vector.extract_strided_slice %6 {offsets = [0, 352], sizes = [16, 32], strides = [1, 1]} : vector<32x384xbf16> to vector<16x32xbf16>
    %cst_24 = arith.constant dense<0.000000e+00> : vector<16x16xf32>
    %70 = tpu.matmul %67, %68, %cst_24 {dimension_numbers = #tpu.dot_dimension_numbers<[1], [1], [0], [0], [0, 0, 1, 0], [], []>} : vector<16x32xbf16>, vector<16x32xbf16>, vector<16x16xf32> -> vector<16x16xf32>
    %cst_25 = arith.constant 0.176776692 : f32
    %71 = vector.broadcast %cst_25 : f32 to vector<16x16xf32>
    %72 = arith.mulf %70, %71 : vector<16x16xf32>
    %cst_26 = arith.constant dense<0xFF800000> : vector<16xf32>
    %73 = vector.multi_reduction <maximumf>, %72, %cst_26 [1] : vector<16x16xf32> to vector<16xf32>
    %74 = vector.shape_cast %73 : vector<16xf32> to vector<16x1xf32>
    %75 = vector.broadcast %74 : vector<16x1xf32> to vector<16x16xf32>
    %76 = arith.subf %72, %75 : vector<16x16xf32>
    %77 = math.exp %76 : vector<16x16xf32>
    %cst_27 = arith.constant dense<0.000000e+00> : vector<16xf32>
    %78 = vector.multi_reduction <add>, %77, %cst_27 [1] : vector<16x16xf32> to vector<16xf32>
    %79 = vector.shape_cast %78 : vector<16xf32> to vector<16x1xf32>
    %80 = tpu.reciprocal %79 {approx = true} : vector<16x1xf32> -> vector<16x1xf32>
    %81 = vector.broadcast %80 : vector<16x1xf32> to vector<16x16xf32>
    %82 = arith.mulf %77, %81 : vector<16x16xf32>
    %83 = arith.truncf %82 : vector<16x16xf32> to vector<16x16xbf16>
    %cst_28 = arith.constant dense<0.000000e+00> : vector<16x32xf32>
    %84 = tpu.matmul %83, %69, %cst_28 {dimension_numbers = #tpu.dot_dimension_numbers<[1], [0], [0], [1], [0, 0, 1, 1], [], []>} : vector<16x16xbf16>, vector<16x32xbf16>, vector<16x32xf32> -> vector<16x32xf32>
    %85 = arith.truncf %84 : vector<16x32xf32> to vector<16x32xbf16>
    %c0_29 = arith.constant 0 : index
    %c96 = arith.constant 96 : index
    %86 = vector.load %arg7[%c0_29, %c96] : memref<32x128xbf16, #tpu.memory_space<vmem>>, vector<16x32xbf16>
    tpu.vector_store %arg7[%c0_29, %c96], %85 {strides = array<i32>} : memref<32x128xbf16, #tpu.memory_space<vmem>>, vector<16x32xbf16>,
    %87 = vector.extract_strided_slice %6 {offsets = [16, 0], sizes = [16, 32], strides = [1, 1]} : vector<32x384xbf16> to vector<16x32xbf16>
    %88 = vector.extract_strided_slice %6 {offsets = [16, 128], sizes = [16, 32], strides = [1, 1]} : vector<32x384xbf16> to vector<16x32xbf16>
    %89 = vector.extract_strided_slice %6 {offsets = [16, 256], sizes = [16, 32], strides = [1, 1]} : vector<32x384xbf16> to vector<16x32xbf16>
    %cst_30 = arith.constant dense<0.000000e+00> : vector<16x16xf32>
    %90 = tpu.matmul %87, %88, %cst_30 {dimension_numbers = #tpu.dot_dimension_numbers<[1], [1], [0], [0], [0, 0, 1, 0], [], []>} : vector<16x32xbf16>, vector<16x32xbf16>, vector<16x16xf32> -> vector<16x16xf32>
    %cst_31 = arith.constant 0.176776692 : f32
    %91 = vector.broadcast %cst_31 : f32 to vector<16x16xf32>
    %92 = arith.mulf %90, %91 : vector<16x16xf32>
    %cst_32 = arith.constant dense<0xFF800000> : vector<16xf32>
    %93 = vector.multi_reduction <maximumf>, %92, %cst_32 [1] : vector<16x16xf32> to vector<16xf32>
    %94 = vector.shape_cast %93 : vector<16xf32> to vector<16x1xf32>
    %95 = vector.broadcast %94 : vector<16x1xf32> to vector<16x16xf32>
    %96 = arith.subf %92, %95 : vector<16x16xf32>
    %97 = math.exp %96 : vector<16x16xf32>
    %cst_33 = arith.constant dense<0.000000e+00> : vector<16xf32>
    %98 = vector.multi_reduction <add>, %97, %cst_33 [1] : vector<16x16xf32> to vector<16xf32>
    %99 = vector.shape_cast %98 : vector<16xf32> to vector<16x1xf32>
    %100 = tpu.reciprocal %99 {approx = true} : vector<16x1xf32> -> vector<16x1xf32>
    %101 = vector.broadcast %100 : vector<16x1xf32> to vector<16x16xf32>
    %102 = arith.mulf %97, %101 : vector<16x16xf32>
    %103 = arith.truncf %102 : vector<16x16xf32> to vector<16x16xbf16>
    %cst_34 = arith.constant dense<0.000000e+00> : vector<16x32xf32>
    %104 = tpu.matmul %103, %89, %cst_34 {dimension_numbers = #tpu.dot_dimension_numbers<[1], [0], [0], [1], [0, 0, 1, 1], [], []>} : vector<16x16xbf16>, vector<16x32xbf16>, vector<16x32xf32> -> vector<16x32xf32>
    %105 = arith.truncf %104 : vector<16x32xf32> to vector<16x32xbf16>
    %c16 = arith.constant 16 : index
    %c0_35 = arith.constant 0 : index
    %106 = vector.load %arg7[%c16, %c0_35] : memref<32x128xbf16, #tpu.memory_space<vmem>>, vector<16x32xbf16>
    tpu.vector_store %arg7[%c16, %c0_35], %105 {strides = array<i32>} : memref<32x128xbf16, #tpu.memory_space<vmem>>, vector<16x32xbf16>,
    %107 = vector.extract_strided_slice %6 {offsets = [16, 32], sizes = [16, 32], strides = [1, 1]} : vector<32x384xbf16> to vector<16x32xbf16>
    %108 = vector.extract_strided_slice %6 {offsets = [16, 160], sizes = [16, 32], strides = [1, 1]} : vector<32x384xbf16> to vector<16x32xbf16>
    %109 = vector.extract_strided_slice %6 {offsets = [16, 288], sizes = [16, 32], strides = [1, 1]} : vector<32x384xbf16> to vector<16x32xbf16>
    %cst_36 = arith.constant dense<0.000000e+00> : vector<16x16xf32>
    %110 = tpu.matmul %107, %108, %cst_36 {dimension_numbers = #tpu.dot_dimension_numbers<[1], [1], [0], [0], [0, 0, 1, 0], [], []>} : vector<16x32xbf16>, vector<16x32xbf16>, vector<16x16xf32> -> vector<16x16xf32>
    %cst_37 = arith.constant 0.176776692 : f32
    %111 = vector.broadcast %cst_37 : f32 to vector<16x16xf32>
    %112 = arith.mulf %110, %111 : vector<16x16xf32>
    %cst_38 = arith.constant dense<0xFF800000> : vector<16xf32>
    %113 = vector.multi_reduction <maximumf>, %112, %cst_38 [1] : vector<16x16xf32> to vector<16xf32>
    %114 = vector.shape_cast %113 : vector<16xf32> to vector<16x1xf32>
    %115 = vector.broadcast %114 : vector<16x1xf32> to vector<16x16xf32>
    %116 = arith.subf %112, %115 : vector<16x16xf32>
    %117 = math.exp %116 : vector<16x16xf32>
    %cst_39 = arith.constant dense<0.000000e+00> : vector<16xf32>
    %118 = vector.multi_reduction <add>, %117, %cst_39 [1] : vector<16x16xf32> to vector<16xf32>
    %119 = vector.shape_cast %118 : vector<16xf32> to vector<16x1xf32>
    %120 = tpu.reciprocal %119 {approx = true} : vector<16x1xf32> -> vector<16x1xf32>
    %121 = vector.broadcast %120 : vector<16x1xf32> to vector<16x16xf32>
    %122 = arith.mulf %117, %121 : vector<16x16xf32>
    %123 = arith.truncf %122 : vector<16x16xf32> to vector<16x16xbf16>
    %cst_40 = arith.constant dense<0.000000e+00> : vector<16x32xf32>
    %124 = tpu.matmul %123, %109, %cst_40 {dimension_numbers = #tpu.dot_dimension_numbers<[1], [0], [0], [1], [0, 0, 1, 1], [], []>} : vector<16x16xbf16>, vector<16x32xbf16>, vector<16x32xf32> -> vector<16x32xf32>
    %125 = arith.truncf %124 : vector<16x32xf32> to vector<16x32xbf16>
    %c16_41 = arith.constant 16 : index
    %c32_42 = arith.constant 32 : index
    %126 = vector.load %arg7[%c16_41, %c32_42] : memref<32x128xbf16, #tpu.memory_space<vmem>>, vector<16x32xbf16>
    tpu.vector_store %arg7[%c16_41, %c32_42], %125 {strides = array<i32>} : memref<32x128xbf16, #tpu.memory_space<vmem>>, vector<16x32xbf16>,
    %127 = vector.extract_strided_slice %6 {offsets = [16, 64], sizes = [16, 32], strides = [1, 1]} : vector<32x384xbf16> to vector<16x32xbf16>
    %128 = vector.extract_strided_slice %6 {offsets = [16, 192], sizes = [16, 32], strides = [1, 1]} : vector<32x384xbf16> to vector<16x32xbf16>
    %129 = vector.extract_strided_slice %6 {offsets = [16, 320], sizes = [16, 32], strides = [1, 1]} : vector<32x384xbf16> to vector<16x32xbf16>
    %cst_43 = arith.constant dense<0.000000e+00> : vector<16x16xf32>
    %130 = tpu.matmul %127, %128, %cst_43 {dimension_numbers = #tpu.dot_dimension_numbers<[1], [1], [0], [0], [0, 0, 1, 0], [], []>} : vector<16x32xbf16>, vector<16x32xbf16>, vector<16x16xf32> -> vector<16x16xf32>
    %cst_44 = arith.constant 0.176776692 : f32
    %131 = vector.broadcast %cst_44 : f32 to vector<16x16xf32>
    %132 = arith.mulf %130, %131 : vector<16x16xf32>
    %cst_45 = arith.constant dense<0xFF800000> : vector<16xf32>
    %133 = vector.multi_reduction <maximumf>, %132, %cst_45 [1] : vector<16x16xf32> to vector<16xf32>
    %134 = vector.shape_cast %133 : vector<16xf32> to vector<16x1xf32>
    %135 = vector.broadcast %134 : vector<16x1xf32> to vector<16x16xf32>
    %136 = arith.subf %132, %135 : vector<16x16xf32>
    %137 = math.exp %136 : vector<16x16xf32>
    %cst_46 = arith.constant dense<0.000000e+00> : vector<16xf32>
    %138 = vector.multi_reduction <add>, %137, %cst_46 [1] : vector<16x16xf32> to vector<16xf32>
    %139 = vector.shape_cast %138 : vector<16xf32> to vector<16x1xf32>
    %140 = tpu.reciprocal %139 {approx = true} : vector<16x1xf32> -> vector<16x1xf32>
    %141 = vector.broadcast %140 : vector<16x1xf32> to vector<16x16xf32>
    %142 = arith.mulf %137, %141 : vector<16x16xf32>
    %143 = arith.truncf %142 : vector<16x16xf32> to vector<16x16xbf16>
    %cst_47 = arith.constant dense<0.000000e+00> : vector<16x32xf32>
    %144 = tpu.matmul %143, %129, %cst_47 {dimension_numbers = #tpu.dot_dimension_numbers<[1], [0], [0], [1], [0, 0, 1, 1], [], []>} : vector<16x16xbf16>, vector<16x32xbf16>, vector<16x32xf32> -> vector<16x32xf32>
    %145 = arith.truncf %144 : vector<16x32xf32> to vector<16x32xbf16>
    %c16_48 = arith.constant 16 : index
    %c64_49 = arith.constant 64 : index
    %146 = vector.load %arg7[%c16_48, %c64_49] : memref<32x128xbf16, #tpu.memory_space<vmem>>, vector<16x32xbf16>
    tpu.vector_store %arg7[%c16_48, %c64_49], %145 {strides = array<i32>} : memref<32x128xbf16, #tpu.memory_space<vmem>>, vector<16x32xbf16>,
    %147 = vector.extract_strided_slice %6 {offsets = [16, 96], sizes = [16, 32], strides = [1, 1]} : vector<32x384xbf16> to vector<16x32xbf16>
    %148 = vector.extract_strided_slice %6 {offsets = [16, 224], sizes = [16, 32], strides = [1, 1]} : vector<32x384xbf16> to vector<16x32xbf16>
    %149 = vector.extract_strided_slice %6 {offsets = [16, 352], sizes = [16, 32], strides = [1, 1]} : vector<32x384xbf16> to vector<16x32xbf16>
    %cst_50 = arith.constant dense<0.000000e+00> : vector<16x16xf32>
    %150 = tpu.matmul %147, %148, %cst_50 {dimension_numbers = #tpu.dot_dimension_numbers<[1], [1], [0], [0], [0, 0, 1, 0], [], []>} : vector<16x32xbf16>, vector<16x32xbf16>, vector<16x16xf32> -> vector<16x16xf32>
    %cst_51 = arith.constant 0.176776692 : f32
    %151 = vector.broadcast %cst_51 : f32 to vector<16x16xf32>
    %152 = arith.mulf %150, %151 : vector<16x16xf32>
    %cst_52 = arith.constant dense<0xFF800000> : vector<16xf32>
    %153 = vector.multi_reduction <maximumf>, %152, %cst_52 [1] : vector<16x16xf32> to vector<16xf32>
    %154 = vector.shape_cast %153 : vector<16xf32> to vector<16x1xf32>
    %155 = vector.broadcast %154 : vector<16x1xf32> to vector<16x16xf32>
    %156 = arith.subf %152, %155 : vector<16x16xf32>
    %157 = math.exp %156 : vector<16x16xf32>
    %cst_53 = arith.constant dense<0.000000e+00> : vector<16xf32>
    %158 = vector.multi_reduction <add>, %157, %cst_53 [1] : vector<16x16xf32> to vector<16xf32>
    %159 = vector.shape_cast %158 : vector<16xf32> to vector<16x1xf32>
    %160 = tpu.reciprocal %159 {approx = true} : vector<16x1xf32> -> vector<16x1xf32>
    %161 = vector.broadcast %160 : vector<16x1xf32> to vector<16x16xf32>
    %162 = arith.mulf %157, %161 : vector<16x16xf32>
    %163 = arith.truncf %162 : vector<16x16xf32> to vector<16x16xbf16>
    %cst_54 = arith.constant dense<0.000000e+00> : vector<16x32xf32>
    %164 = tpu.matmul %163, %149, %cst_54 {dimension_numbers = #tpu.dot_dimension_numbers<[1], [0], [0], [1], [0, 0, 1, 1], [], []>} : vector<16x16xbf16>, vector<16x32xbf16>, vector<16x32xf32> -> vector<16x32xf32>
    %165 = arith.truncf %164 : vector<16x32xf32> to vector<16x32xbf16>
    %c16_55 = arith.constant 16 : index
    %c96_56 = arith.constant 96 : index
    %166 = vector.load %arg7[%c16_55, %c96_56] : memref<32x128xbf16, #tpu.memory_space<vmem>>, vector<16x32xbf16>
    tpu.vector_store %arg7[%c16_55, %c96_56], %165 {strides = array<i32>} : memref<32x128xbf16, #tpu.memory_space<vmem>>, vector<16x32xbf16>,
    %c0_57 = arith.constant 0 : index
    %c0_58 = arith.constant 0 : index
    %167 = vector.load %arg7[%c0_57, %c0_58] : memref<32x128xbf16, #tpu.memory_space<vmem>>, vector<32x128xbf16>
    %c0_59 = arith.constant 0 : index
    %c0_60 = arith.constant 0 : index
    %168 = vector.load %arg4[%c0_59, %c0_60] : memref<128x128xbf16, #tpu.memory_space<vmem>>, vector<128x128xbf16>
    %cst_61 = arith.constant dense<0.000000e+00> : vector<32x128xf32>
    %169 = tpu.matmul %167, %168, %cst_61 {dimension_numbers = #tpu.dot_dimension_numbers<[1], [0], [0], [1], [0, 0, 1, 1], [], []>} : vector<32x128xbf16>, vector<128x128xbf16>, vector<32x128xf32> -> vector<32x128xf32>
    %c0_62 = arith.constant 0 : index
    %c0_63 = arith.constant 0 : index
    %170 = vector.load %arg5[%c0_62, %c0_63] : memref<1x128xf32, #tpu.memory_space<vmem>>, vector<1x128xf32>
    %171 = vector.broadcast %170 : vector<1x128xf32> to vector<32x128xf32>
    %172 = arith.addf %169, %171 : vector<32x128xf32>
    %173 = arith.truncf %172 : vector<32x128xf32> to vector<32x128xbf16>
    %c0_64 = arith.constant 0 : index
    %c0_65 = arith.constant 0 : index
    %174 = vector.load %arg6[%c0_64, %c0_65] : memref<32x128xbf16, #tpu.memory_space<vmem>>, vector<32x128xbf16>
    tpu.vector_store %arg6[%c0_64, %c0_65], %173 {strides = array<i32>} : memref<32x128xbf16, #tpu.memory_space<vmem>>, vector<32x128xbf16>,
    return
  }
  func.func @transform_0(%arg0: i32) -> (i32, i32) {
    %c0_i32 = arith.constant 0 : i32
    %c0_i32_0 = arith.constant 0 : i32
    return %arg0, %c0_i32 : i32, i32
  }
  func.func @transform_1(%arg0: i32) -> (i32, i32) {
    %c0_i32 = arith.constant 0 : i32
    %c0_i32_0 = arith.constant 0 : i32
    %c0_i32_1 = arith.constant 0 : i32
    return %c0_i32, %c0_i32_0 : i32, i32
  }
  func.func @transform_2(%arg0: i32) -> (i32, i32) {
    %c0_i32 = arith.constant 0 : i32
    %c0_i32_0 = arith.constant 0 : i32
    %c0_i32_1 = arith.constant 0 : i32
    return %c0_i32, %c0_i32_0 : i32, i32
  }
  func.func @transform_3(%arg0: i32) -> (i32, i32) {
    %c0_i32 = arith.constant 0 : i32
    %c0_i32_0 = arith.constant 0 : i32
    %c0_i32_1 = arith.constant 0 : i32
    return %c0_i32, %c0_i32_0 : i32, i32
  }
  func.func @transform_4(%arg0: i32) -> (i32, i32) {
    %c0_i32 = arith.constant 0 : i32
    %c0_i32_0 = arith.constant 0 : i32
    %c0_i32_1 = arith.constant 0 : i32
    return %c0_i32, %c0_i32_0 : i32, i32
  }
  func.func @transform_5(%arg0: i32) -> (i32, i32) {
    %c0_i32 = arith.constant 0 : i32
    %c0_i32_0 = arith.constant 0 : i32
    return %arg0, %c0_i32 : i32, i32
  }
}

</mosaic_0001>

<llo_original>
// kernel: tpu_custom_call.1
$region0: #{tpu_custom_call.1}
  #allocation0 [shape = 'u32[]', space=smem, size = 0x4, offset = 0x4, fixed_abs, tag = 'smem constant byte address 0x4 - core index']
  #allocation1 [shape = 'u32[144,128]{1,0:T(1,128)}', space=vmem, size = 0x12000, scoped, tag = 'internal scratch']
  #allocation2 [shape = 'bf16[32,128]{1,0:T(8,128)(2,1)}', space=vmem, size = 0x2000, scoped, tag = 'scratch operand']
  %s0 = inlined_call_operand.hbm [shape: bf16[64,128], index: 0, kind: input, shape index: {}]
  %s1 = inlined_call_operand.hbm [shape: bf16[128,384], index: 1, kind: input, shape index: {}]
  %s2 = inlined_call_operand.vmem [shape: f32[1,384], index: 2, kind: input, shape index: {}]
  %s3 = inlined_call_operand.hbm [shape: bf16[128,128], index: 3, kind: input, shape index: {}]
  %s4 = inlined_call_operand.vmem [shape: f32[1,128], index: 4, kind: input, shape index: {}]
  %s5 = inlined_call_operand.hbm [shape: bf16[64,128], index: 5, kind: output, shape index: {}]
  %s6 = sld [smem:[#allocation0]]
  $region65: #{tpu_custom_call.1} parent=0
    _
  %s8 = ssub.s32 1, %s6
  %s9 = scalar_select 0, %s8, %s6
  $region1: #{tpu_custom_call.1} parent=0
    #allocation3 [shape = 'u8[16384]{0}', space=vmem, size = 0x4000, scoped, tag = 'input window, operand 0']
    #allocation4 [shape = 's32[2]{0}', space=sflag, size = 0x8, scoped, tag = 'scoped memory for tpu_custom_call.1']
    #allocation5 [shape = 's32[2]{0}', space=sflag, size = 0x8, scoped, tag = 'scoped memory for tpu_custom_call.1']
    #allocation6 [shape = 'u8[98304]{0}', space=vmem, size = 0x18000, scoped, tag = 'input window, operand 1, single buffered']
    #allocation7 [shape = 's32[1]{0}', space=sflag, size = 0x4, scoped, tag = 'scoped memory for tpu_custom_call.1']
    #allocation8 [shape = 'u8[32768]{0}', space=vmem, size = 0x8000, scoped, tag = 'input window, operand 3, single buffered']
    #allocation9 [shape = 'u8[16384]{0}', space=vmem, size = 0x4000, scoped, tag = 'output window, operand 0']
    %10 = vsyncpa [#allocation4], 0
    %s11 = scalar_lea.sflag [#allocation4], 1
    %12 = vsyncpa %s11, 0
    %13 = vsyncpa [#allocation7], 0
    %14 = vsyncpa [#allocation5], 0
    %s15 = scalar_lea.sflag [#allocation5], 1
    %16 = vsyncpa %s15, 0
    loop: start=0, step=1, limit=4
    $region2: #{tpu_custom_call.1} parent=1 // loop_pre_header
      _
    $region3: #{tpu_custom_call.1} parent=1 // loop_header
      %s18 = sphi 0, %s22
      %p19 = scmp.ge.s32.totalorder %s18, 4
      %s28 = sphi 0, %s30
      %s31 = sphi 0, %s28
      %s32 = sphi 0, %s31
      %s48 = sphi 0, %s32
      %s52 = sphi 0, %s52
      %s54 = sphi 0, %s52
      %s55 = sphi 0, %s54
      %s69 = sphi 0, %s55
      %s73 = sphi 0, %s73
      %s75 = sphi 0, %s73
      %s76 = sphi 0, %s75
      %s90 = sphi 0, %s76
      %s94 = sphi 0, %s94
      %s96 = sphi 0, %s94
      %s97 = sphi 0, %s96
      %s111 = sphi 0, %s97
      %s115 = sphi 0, %s115
      %s117 = sphi 0, %s115
      %s118 = sphi 0, %s117
      %s132 = sphi 0, %s118
      %s138 = sphi 0, %s140
      %s141 = sphi 0, %s138
      %s142 = sphi 0, %s141
      %s158 = sphi 0, %s142
    $region4: #{tpu_custom_call.1} parent=1 // loop_header_branch
      %21 = sbr.rel (%p19) target = $region8
    $region5: #{tpu_custom_call.1} parent=1 // loop_body
      %s23 = ssub.s32 %s18, 1
      %s24 = ssub.s32 %s18, 2
      %s25 = sadd.s32 %s18, 1
      %s26 = ssub.s32 %s18, %s25
      %p27 = scmp.eq.s32.totalorder %s26, 0
      %s29 = sadd.s32 %s28, 1
      %s30 = scalar_select %p27, %s28, %s29
      %p33 = pneg %p27
      %p34 = scmp.eq.s32.totalorder %s18, 1
      %p35 = por %p33, %p34
      %p36 = scmp.ne.s32.totalorder %s28, %s31
      %p37 = scmp.eq.s32.totalorder %s18, 0
      %p38 = por %p36, %p37
      %p39 = scmp.ne.s32.totalorder %s28, %s31
      %p40 = scmp.eq.s32.totalorder %s23, 1
      %p41 = por %p39, %p40
      %p42 = scmp.ne.s32.totalorder %s31, %s32
      %p43 = scmp.eq.s32.totalorder %s23, 0
      %p44 = por %p42, %p43
      %p45 = scmp.ne.s32.totalorder %s31, %s32
      %p46 = scmp.eq.s32.totalorder %s24, 1
      %p47 = por %p45, %p46
      %p49 = scmp.ne.s32.totalorder %s32, %s48
      %p50 = scmp.eq.s32.totalorder %s24, 0
      %p51 = por %p49, %p50
      %s53 = sadd.s32 %s52, 1
      %p56 = scmp.eq.s32.totalorder %s18, 1
      %p57 = scmp.ne.s32.totalorder %s52, %s54
      %p58 = scmp.eq.s32.totalorder %s18, 0
      %p59 = por %p57, %p58
      %p60 = scmp.ne.s32.totalorder %s52, %s54
      %p61 = scmp.eq.s32.totalorder %s23, 1
      %p62 = por %p60, %p61
      %p63 = scmp.ne.s32.totalorder %s54, %s55
      %p64 = scmp.eq.s32.totalorder %s23, 0
      %p65 = por %p63, %p64
      %p66 = scmp.ne.s32.totalorder %s54, %s55
      %p67 = scmp.eq.s32.totalorder %s24, 1
      %p68 = por %p66, %p67
      %p70 = scmp.ne.s32.totalorder %s55, %s69
      %p71 = scmp.eq.s32.totalorder %s24, 0
      %p72 = por %p70, %p71
      %s74 = sadd.s32 %s73, 1
      %p77 = scmp.eq.s32.totalorder %s18, 1
      %p78 = scmp.ne.s32.totalorder %s73, %s75
      %p79 = scmp.eq.s32.totalorder %s18, 0
      %p80 = por %p78, %p79
      %p81 = scmp.ne.s32.totalorder %s73, %s75
      %p82 = scmp.eq.s32.totalorder %s23, 1
      %p83 = por %p81, %p82
      %p84 = scmp.ne.s32.totalorder %s75, %s76
      %p85 = scmp.eq.s32.totalorder %s23, 0
      %p86 = por %p84, %p85
      %p87 = scmp.ne.s32.totalorder %s75, %s76
      %p88 = scmp.eq.s32.totalorder %s24, 1
      %p89 = por %p87, %p88
      %p91 = scmp.ne.s32.totalorder %s76, %s90
      %p92 = scmp.eq.s32.totalorder %s24, 0
      %p93 = por %p91, %p92
      %s95 = sadd.s32 %s94, 1
      %p98 = scmp.eq.s32.totalorder %s18, 1
      %p99 = scmp.ne.s32.totalorder %s94, %s96
      %p100 = scmp.eq.s32.totalorder %s18, 0
      %p101 = por %p99, %p100
      %p102 = scmp.ne.s32.totalorder %s94, %s96
      %p103 = scmp.eq.s32.totalorder %s23, 1
      %p104 = por %p102, %p103
      %p105 = scmp.ne.s32.totalorder %s96, %s97
      %p106 = scmp.eq.s32.totalorder %s23, 0
      %p107 = por %p105, %p106
      %p108 = scmp.ne.s32.totalorder %s96, %s97
      %p109 = scmp.eq.s32.totalorder %s24, 1
      %p110 = por %p108, %p109
      %p112 = scmp.ne.s32.totalorder %s97, %s111
      %p113 = scmp.eq.s32.totalorder %s24, 0
      %p114 = por %p112, %p113
      %s116 = sadd.s32 %s115, 1
      %p119 = scmp.eq.s32.totalorder %s18, 1
      %p120 = scmp.ne.s32.totalorder %s115, %s117
      %p121 = scmp.eq.s32.totalorder %s18, 0
      %p122 = por %p120, %p121
      %p123 = scmp.ne.s32.totalorder %s115, %s117
      %p124 = scmp.eq.s32.totalorder %s23, 1
      %p125 = por %p123, %p124
      %p126 = scmp.ne.s32.totalorder %s117, %s118
      %p127 = scmp.eq.s32.totalorder %s23, 0
      %p128 = por %p126, %p127
      %p129 = scmp.ne.s32.totalorder %s117, %s118
      %p130 = scmp.eq.s32.totalorder %s24, 1
      %p131 = por %p129, %p130
      %p133 = scmp.ne.s32.totalorder %s118, %s132
      %p134 = scmp.eq.s32.totalorder %s24, 0
      %p135 = por %p133, %p134
      %s136 = ssub.s32 %s18, %s25
      %p137 = scmp.eq.s32.totalorder %s136, 0
      %s139 = sadd.s32 %s138, 1
      %s140 = scalar_select %p137, %s138, %s139
      %p143 = pneg %p137
      %p144 = scmp.eq.s32.totalorder %s18, 1
      %p145 = por %p143, %p144
      %p146 = scmp.ne.s32.totalorder %s138, %s141
      %p147 = scmp.eq.s32.totalorder %s18, 0
      %p148 = por %p146, %p147
      %p149 = scmp.ne.s32.totalorder %s138, %s141
      %p150 = scmp.eq.s32.totalorder %s23, 1
      %p151 = por %p149, %p150
      %p152 = scmp.ne.s32.totalorder %s141, %s142
      %p153 = scmp.eq.s32.totalorder %s23, 0
      %p154 = por %p152, %p153
      %p155 = scmp.ne.s32.totalorder %s141, %s142
      %p156 = scmp.eq.s32.totalorder %s24, 1
      %p157 = por %p155, %p156
      %p159 = scmp.ne.s32.totalorder %s142, %s158
      %p160 = scmp.eq.s32.totalorder %s24, 0
      %p161 = por %p159, %p160
      %p162 = scmp.le.s32.totalorder 1, %s18
      %p163 = scmp.lt.s32.totalorder %s18, 3
      %p164 = pnand %p162, %p163
      %p165 = pneg %p164
      // Predicated region
      $region9: #{tpu_custom_call.1} parent=5 // pred_check
        _
      $region10: #{tpu_custom_call.1} parent=5 // pred_check_branch
        %167 = sbr.rel (%p164) target = $region12
      $region11: #{tpu_custom_call.1} parent=5 // pred_region
        %s168 = ssub.s32 %s18, 1
        // Predicated region
        $region13: #{tpu_custom_call.1} parent=11 // pred_check
          %p169 = pneg %p65
        $region14: #{tpu_custom_call.1} parent=11 // pred_check_branch
          %171 = sbr.rel (%p169) target = $region16
        $region15: #{tpu_custom_call.1} parent=11 // pred_region
          %s173 = ssub.s32 3072, 3072
          %174 = vsyncadd [#allocation7], %s173
          %s175 = sshll.u32 [#allocation6], 4
          %s176 = int_to_ptr.vmem [resolvable:$true] %s175
          %181 = dma.hbm_to_vmem [thread:$0]  %s1, 3072, %s176, [#allocation7], 192, 192, 12
        $region16: #{tpu_custom_call.1} parent=11 // pred_fallthru
          _
        // Predicated region
        $region17: #{tpu_custom_call.1} parent=11 // pred_check
          %p182 = pneg %p86
        $region18: #{tpu_custom_call.1} parent=11 // pred_check_branch
          %184 = sbr.rel (%p182) target = $region20
        $region19: #{tpu_custom_call.1} parent=11 // pred_region
          _
        $region20: #{tpu_custom_call.1} parent=11 // pred_fallthru
          _
        // Predicated region
        $region21: #{tpu_custom_call.1} parent=11 // pred_check
          %p185 = pneg %p107
        $region22: #{tpu_custom_call.1} parent=11 // pred_check_branch
          %187 = sbr.rel (%p185) target = $region24
        $region23: #{tpu_custom_call.1} parent=11 // pred_region
          %s189 = ssub.s32 1024, 1024
          %190 = vsyncadd [#allocation7], %s189
          %s191 = sshll.u32 [#allocation8], 4
          %s192 = int_to_ptr.vmem [resolvable:$true] %s191
          %197 = dma.hbm_to_vmem [thread:$0]  %s3, 1024, %s192, [#allocation7], 64, 64, 4
        $region24: #{tpu_custom_call.1} parent=11 // pred_fallthru
          _
        // Predicated region
        $region25: #{tpu_custom_call.1} parent=11 // pred_check
          %p198 = pneg %p128
        $region26: #{tpu_custom_call.1} parent=11 // pred_check_branch
          %200 = sbr.rel (%p198) target = $region28
        $region27: #{tpu_custom_call.1} parent=11 // pred_region
          _
        $region28: #{tpu_custom_call.1} parent=11 // pred_fallthru
          _
      $region12: #{tpu_custom_call.1} parent=5 // pred_fallthru
        _
      %p201 = scmp.lt.s32.totalorder %s18, 2
      // Predicated region
      $region29: #{tpu_custom_call.1} parent=5 // pred_check
        %p202 = pneg %p201
      $region30: #{tpu_custom_call.1} parent=5 // pred_check_branch
        %204 = sbr.rel (%p202) target = $region32
      $region31: #{tpu_custom_call.1} parent=5 // pred_region
        // Predicated region
        $region33: #{tpu_custom_call.1} parent=31 // pred_check
          %p205 = pneg %p38
        $region34: #{tpu_custom_call.1} parent=31 // pred_check_branch
          %207 = sbr.rel (%p205) target = $region36
        $region35: #{tpu_custom_call.1} parent=31 // pred_region
          %s208 = sand.u32 %s28, 1
          %s209 = scalar_lea.sflag [#allocation4], %s208
          %s210 = sand.u32 %s28, 1
          %s211 = smul.addr %s210, 16
          %s212 = scalar_lea.vmem [#allocation3], %s211
          %s213 = smul.u32 4, %s18
          %s215 = ssub.s32 256, 256
          %216 = vsyncadd %s209, %s215
          %s217 = smul.addr %s213, 64
          %s218 = scalar_lea.hbm %s0, %s217
          %s219 = sshll.u32 %s212, 4
          %s220 = int_to_ptr.vmem [resolvable:$true] %s219
          %225 = dma.hbm_to_vmem [thread:$0]  %s218, 256, %s220, %s209, 64, 64, 4
        $region36: #{tpu_custom_call.1} parent=31 // pred_fallthru
          _
      $region32: #{tpu_custom_call.1} parent=5 // pred_fallthru
        _
      %p226 = scmp.le.s32.totalorder 1, %s18
      %p227 = scmp.lt.s32.totalorder %s18, 3
      %p228 = pnand %p226, %p227
      %p229 = pneg %p228
      // Predicated region
      $region37: #{tpu_custom_call.1} parent=5 // pred_check
        _
      $region38: #{tpu_custom_call.1} parent=5 // pred_check_branch
        %231 = sbr.rel (%p228) target = $region40
      $region39: #{tpu_custom_call.1} parent=5 // pred_region
        %s232 = ssub.s32 %s18, 1
        %s233 = sand.u32 %s31, 1
        %s234 = scalar_lea.sflag [#allocation4], %s233
        %s235 = sand.u32 %s31, 1
        %s236 = smul.addr %s235, 16
        %s237 = scalar_lea.vmem [#allocation3], %s236
        // Predicated region
        $region41: #{tpu_custom_call.1} parent=39 // pred_check
          %p238 = pneg %p44
        $region42: #{tpu_custom_call.1} parent=39 // pred_check_branch
          %240 = sbr.rel (%p238) target = $region44
        $region43: #{tpu_custom_call.1} parent=39 // pred_region
          %241 = dma.done %s234, 256
        $region44: #{tpu_custom_call.1} parent=39 // pred_fallthru
          _
        // Predicated region
        $region45: #{tpu_custom_call.1} parent=39 // pred_check
          %p242 = pneg %p65
        $region46: #{tpu_custom_call.1} parent=39 // pred_check_branch
          %244 = sbr.rel (%p242) target = $region48
        $region47: #{tpu_custom_call.1} parent=39 // pred_region
          %245 = dma.done [#allocation7], 3072
        $region48: #{tpu_custom_call.1} parent=39 // pred_fallthru
          _
        // Predicated region
        $region49: #{tpu_custom_call.1} parent=39 // pred_check
          %p246 = pneg %p107
        $region50: #{tpu_custom_call.1} parent=39 // pred_check_branch
          %248 = sbr.rel (%p246) target = $region52
        $region51: #{tpu_custom_call.1} parent=39 // pred_region
          %249 = dma.done [#allocation7], 1024
        $region52: #{tpu_custom_call.1} parent=39 // pred_fallthru
          _
        %s250 = sand.u32 %s31, 1
        %s251 = scalar_lea.sflag [#allocation4], %s250
        %s252 = sand.u32 %s31, 1
        %s253 = smul.addr %s252, 16
        %s254 = scalar_lea.vmem [#allocation3], %s253
        %p255 = pneg %p44
        %p256 = pneg %p41
        %p257 = pneg %p65
        %p258 = pneg %p62
        %p259 = pneg %p86
        %p260 = pneg %p83
        %p261 = pneg %p107
        %p262 = pneg %p104
        %p263 = pneg %p128
        %p264 = pneg %p125
        %p265 = pneg %p154
        %p266 = pneg %p151
        %s267 = sand.u32 %s141, 1
        %s268 = scalar_lea.sflag [#allocation5], %s267
        %s269 = sand.u32 %s141, 1
        %s270 = smul.addr %s269, 16
        %s271 = scalar_lea.vmem [#allocation9], %s270
        %s272 = smul.u32 4, %s23
        %s273 = smul.u32 4, %s23
        %v275 = vld [vmem:[%s237] sm:$0xf]
        %v276 = vld [vmem:[%s237 + $0x4] sm:$0xf]
        %v277 = vld [vmem:[%s237 + $0x8] sm:$0xf]
        %v278 = vld [vmem:[%s237 + $0xc] sm:$0xf]
        %v279 = vld [vmem:[#allocation6] sm:$0xff]
        %v280 = vld [vmem:[#allocation6 + $0x8] sm:$0xf]
        %v281 = vld [vmem:[#allocation6 + $0xc] sm:$0xff]
        %v282 = vld [vmem:[#allocation6 + $0x14] sm:$0xf]
        %v283 = vld [vmem:[#allocation6 + $0x18] sm:$0xff]
        %v284 = vld [vmem:[#allocation6 + $0x20] sm:$0xf]
        %v285 = vld [vmem:[#allocation6 + $0x24] sm:$0xff]
        %v286 = vld [vmem:[#allocation6 + $0x2c] sm:$0xf]
        %v287 = vld [vmem:[#allocation6 + $0x30] sm:$0xff]
        %v288 = vld [vmem:[#allocation6 + $0x38] sm:$0xf]
        %v289 = vld [vmem:[#allocation6 + $0x3c] sm:$0xff]
        %v290 = vld [vmem:[#allocation6 + $0x44] sm:$0xf]
        %v291 = vld [vmem:[#allocation6 + $0x48] sm:$0xff]
        %v292 = vld [vmem:[#allocation6 + $0x50] sm:$0xf]
        %v293 = vld [vmem:[#allocation6 + $0x54] sm:$0xff]
        %v294 = vld [vmem:[#allocation6 + $0x5c] sm:$0xf]
        %v295 = vld [vmem:[#allocation6 + $0x60] sm:$0xff]
        %v296 = vld [vmem:[#allocation6 + $0x68] sm:$0xf]
        %v297 = vld [vmem:[#allocation6 + $0x6c] sm:$0xff]
        %v298 = vld [vmem:[#allocation6 + $0x74] sm:$0xf]
        %v299 = vld [vmem:[#allocation6 + $0x78] sm:$0xff]
        %v300 = vld [vmem:[#allocation6 + $0x80] sm:$0xf]
        %v301 = vld [vmem:[#allocation6 + $0x84] sm:$0xff]
        %v302 = vld [vmem:[#allocation6 + $0x8c] sm:$0xf]
        %v303 = vld [vmem:[#allocation6 + $0x90] sm:$0xff]
        %v304 = vld [vmem:[#allocation6 + $0x98] sm:$0xf]
        %v305 = vld [vmem:[#allocation6 + $0x9c] sm:$0xff]
        %v306 = vld [vmem:[#allocation6 + $0xa4] sm:$0xf]
        %v307 = vld [vmem:[#allocation6 + $0xa8] sm:$0xff]
        %v308 = vld [vmem:[#allocation6 + $0xb0] sm:$0xf]
        %v309 = vld [vmem:[#allocation6 + $0xb4] sm:$0xff]
        %v310 = vld [vmem:[#allocation6 + $0xbc] sm:$0xf]
        %v311 = vld [vmem:[%s2] sm:$0x7]
        %v313 = vlaneseq
        %v314 = vshrl.u32 %v313, 7
        %v315 = vsub.s32 0, %v314
        %v316 = vrot.slane %v311, %v315
        %v317 = vlaneseq
        %v318 = vshrl.u32 %v317, 7
        %v319 = vsub.s32 1, %v318
        %v320 = vrot.slane %v311, %v319
        %v321 = vlaneseq
        %v322 = vshrl.u32 %v321, 7
        %v323 = vsub.s32 2, %v322
        %v324 = vrot.slane %v311, %v323
        %v332 = vunpack.c.l.b16 %v275
        %v333 = vunpack.c.l.b16 %v276
        %v334 = vunpack.c.l.b16 %v277
        %v335 = vunpack.c.l.b16 %v278
        %v336 = vpack.c.b16 %v333, %v332
        %v337 = vpack.c.b16 %v335, %v334
        %v372 = vunpack.c.l.b16 %v279
        %v373 = vunpack.c.h.b16 %v279
        %v374 = vunpack.c.l.b16 %v280
        %v375 = vunpack.c.l.b16 %v281
        %v376 = vunpack.c.h.b16 %v281
        %v377 = vunpack.c.l.b16 %v282
        %v378 = vunpack.c.l.b16 %v283
        %v379 = vunpack.c.h.b16 %v283
        %v380 = vunpack.c.l.b16 %v284
        %v381 = vunpack.c.l.b16 %v285
        %v382 = vunpack.c.h.b16 %v285
        %v383 = vunpack.c.l.b16 %v286
        %v384 = vunpack.c.l.b16 %v287
        %v385 = vunpack.c.h.b16 %v287
        %v386 = vunpack.c.l.b16 %v288
        %v387 = vunpack.c.l.b16 %v289
        %v388 = vunpack.c.h.b16 %v289
        %v389 = vunpack.c.l.b16 %v290
        %v390 = vunpack.c.l.b16 %v291
        %v391 = vunpack.c.h.b16 %v291
        %v392 = vunpack.c.l.b16 %v292
        %v393 = vunpack.c.l.b16 %v293
        %v394 = vunpack.c.h.b16 %v293
        %v395 = vunpack.c.l.b16 %v294
        %v396 = vunpack.c.l.b16 %v295
        %v397 = vunpack.c.h.b16 %v295
        %v398 = vunpack.c.l.b16 %v296
        %v399 = vunpack.c.l.b16 %v297
        %v400 = vunpack.c.h.b16 %v297
        %v401 = vunpack.c.l.b16 %v298
        %v402 = vunpack.c.l.b16 %v299
        %v403 = vunpack.c.h.b16 %v299
        %v404 = vunpack.c.l.b16 %v300
        %v405 = vunpack.c.l.b16 %v301
        %v406 = vunpack.c.h.b16 %v301
        %v407 = vunpack.c.l.b16 %v302
        %v408 = vunpack.c.l.b16 %v303
        %v409 = vunpack.c.h.b16 %v303
        %v410 = vunpack.c.l.b16 %v304
        %v411 = vunpack.c.l.b16 %v305
        %v412 = vunpack.c.h.b16 %v305
        %v413 = vunpack.c.l.b16 %v306
        %v414 = vunpack.c.l.b16 %v307
        %v415 = vunpack.c.h.b16 %v307
        %v416 = vunpack.c.l.b16 %v308
        %v417 = vunpack.c.l.b16 %v309
        %v418 = vunpack.c.h.b16 %v309
        %v419 = vunpack.c.l.b16 %v310
        %v420 = vpack.c.b16 %v375, %v372
        %v421 = vpack.c.b16 %v376, %v373
        %v422 = vpack.c.b16 %v377, %v374
        %v423 = vpack.c.b16 %v381, %v378
        %v424 = vpack.c.b16 %v382, %v379
        %v425 = vpack.c.b16 %v383, %v380
        %v426 = vpack.c.b16 %v387, %v384
        %v427 = vpack.c.b16 %v388, %v385
        %v428 = vpack.c.b16 %v389, %v386
        %v429 = vpack.c.b16 %v393, %v390
        %v430 = vpack.c.b16 %v394, %v391
        %v431 = vpack.c.b16 %v395, %v392
        %v432 = vpack.c.b16 %v399, %v396
        %v433 = vpack.c.b16 %v400, %v397
        %v434 = vpack.c.b16 %v401, %v398
        %v435 = vpack.c.b16 %v405, %v402
        %v436 = vpack.c.b16 %v406, %v403
        %v437 = vpack.c.b16 %v407, %v404
        %v438 = vpack.c.b16 %v411, %v408
        %v439 = vpack.c.b16 %v412, %v409
        %v440 = vpack.c.b16 %v413, %v410
        %v441 = vpack.c.b16 %v417, %v414
        %v442 = vpack.c.b16 %v418, %v415
        %v443 = vpack.c.b16 %v419, %v416
        %468 = vmatprep.subr.bf16.mxu0 %v442
        %469 = vmatpush1.bf16.msra.mxu0 %v441
        %470 = vmatprep.subr.bf16.mxu0 %v439
        %471 = vmatpush1.bf16.msra.mxu0 %v438
        %472 = vmatprep.subr.bf16.mxu0 %v436
        %473 = vmatpush1.bf16.msra.mxu0 %v435
        %474 = vmatprep.subr.bf16.mxu0 %v433
        %475 = vmatpush1.bf16.msra.mxu0 %v432
        %476 = vmatprep.subr.bf16.mxu0 %v430
        %477 = vmatpush1.bf16.msra.mxu0 %v429
        %478 = vmatprep.subr.bf16.mxu0 %v427
        %479 = vmatpush1.bf16.msra.mxu0 %v426
        %480 = vmatprep.subr.bf16.mxu0 %v424
        %481 = vmatpush1.bf16.msra.mxu0 %v423
        %482 = vmatprep.subr.bf16.mxu0 %v421
        %483 = vmatpush1.bf16.msra.mxu0 %v420
        %484 = vmatprep.subr.bf16.mxu0 0
        %485 = vmatpush2.bf16.msra.mxu0 0
        %486 = vmatprep.subr.bf16.mxu0 0
        %487 = vmatpush2.bf16.msra.mxu0 0
        %488 = vmatprep.subr.bf16.mxu0 0
        %489 = vmatpush2.bf16.msra.mxu0 0
        %490 = vmatprep.subr.bf16.mxu0 0
        %491 = vmatpush2.bf16.msra.mxu0 0
        %492 = vmatprep.subr.bf16.mxu0 0
        %493 = vmatpush2.bf16.msra.mxu0 0
        %494 = vmatprep.subr.bf16.mxu0 0
        %495 = vmatpush2.bf16.msra.mxu0 0
        %496 = vmatprep.subr.bf16.mxu0 0
        %497 = vmatpush2.bf16.msra.mxu0 0
        %498 = vmatprep.subr.bf16.mxu0 0
        %499 = vmatpush2.bf16.msra.mxu0 0
        %500 = vmatprep.mubr.bf16.mxu0 0
        %501 = vmatmul.mubr.bf16.gmra.mxu0 %v336
        %v502 = vpop.f32.mrf.mxu0
        %v503 = vadd.f32 %v316, %v502
        %v504 = vpop.f32.mrf.mxu0
        %v505 = vadd.f32 %v320, %v504
        %v506 = vpop.f32.mrf.mxu0
        %v507 = vadd.f32 %v316, %v506
        %v508 = vpop.f32.mrf.mxu0
        %v509 = vadd.f32 %v320, %v508
        %510 = vmatprep.mubr.bf16.mxu0 0
        %511 = vmatmul.mubr.bf16.gmra.mxu0 %v337
        %v512 = vpop.f32.mrf.mxu0
        %v513 = vadd.f32 %v316, %v512
        %v514 = vpop.f32.mrf.mxu0
        %v515 = vadd.f32 %v320, %v514
        %v516 = vpop.f32.mrf.mxu0
        %v517 = vadd.f32 %v316, %v516
        %v518 = vpop.f32.mrf.mxu0
        %v519 = vadd.f32 %v320, %v518
        %520 = vdwg.mxu0
        %521 = vmatprep.subr.bf16.mxu0 0
        %522 = vmatpush1.bf16.msra.mxu0 %v443
        %523 = vmatprep.subr.bf16.mxu0 0
        %524 = vmatpush1.bf16.msra.mxu0 %v440
        %525 = vmatprep.subr.bf16.mxu0 0
        %526 = vmatpush1.bf16.msra.mxu0 %v437
        %527 = vmatprep.subr.bf16.mxu0 0
        %528 = vmatpush1.bf16.msra.mxu0 %v434
        %529 = vmatprep.subr.bf16.mxu0 0
        %530 = vmatpush1.bf16.msra.mxu0 %v431
        %531 = vmatprep.subr.bf16.mxu0 0
        %532 = vmatpush1.bf16.msra.mxu0 %v428
        %533 = vmatprep.subr.bf16.mxu0 0
        %534 = vmatpush1.bf16.msra.mxu0 %v425
        %535 = vmatprep.subr.bf16.mxu0 0
        %536 = vmatpush1.bf16.msra.mxu0 %v422
        %537 = vmatprep.subr.bf16.mxu0 0
        %538 = vmatpush2.bf16.msra.mxu0 0
        %539 = vmatprep.subr.bf16.mxu0 0
        %540 = vmatpush2.bf16.msra.mxu0 0
        %541 = vmatprep.subr.bf16.mxu0 0
        %542 = vmatpush2.bf16.msra.mxu0 0
        %543 = vmatprep.subr.bf16.mxu0 0
        %544 = vmatpush2.bf16.msra.mxu0 0
        %545 = vmatprep.subr.bf16.mxu0 0
        %546 = vmatpush2.bf16.msra.mxu0 0
        %547 = vmatprep.subr.bf16.mxu0 0
        %548 = vmatpush2.bf16.msra.mxu0 0
        %549 = vmatprep.subr.bf16.mxu0 0
        %550 = vmatpush2.bf16.msra.mxu0 0
        %551 = vmatprep.subr.bf16.mxu0 0
        %552 = vmatpush2.bf16.msra.mxu0 0
        %553 = vmatprep.mubr.bf16.mxu0 0
        %554 = vmatmul.mubr.bf16.gmra.mxu0 %v336
        %v555 = vpop.f32.mrf.mxu0
        %v556 = vadd.f32 %v324, %v555
        %v557 = vpop.f32.mrf.mxu0
        %v558 = vpop.f32.mrf.mxu0
        %v559 = vadd.f32 %v324, %v558
        %v560 = vpop.f32.mrf.mxu0
        %561 = vmatprep.mubr.bf16.mxu0 0
        %562 = vmatmul.mubr.bf16.gmra.mxu0 %v337
        %v563 = vpop.f32.mrf.mxu0
        %v564 = vadd.f32 %v324, %v563
        %v565 = vpop.f32.mrf.mxu0
        %v566 = vpop.f32.mrf.mxu0
        %v567 = vadd.f32 %v324, %v566
        %v568 = vpop.f32.mrf.mxu0
        %569 = vdwg.mxu0
        %v570 = vpack.c.bf16 %v507, %v503
        %v571 = vpack.c.bf16 %v509, %v505
        %v572 = vpack.c.bf16 %v559, %v556
        %v573 = vpack.c.bf16 %v517, %v513
        %v574 = vpack.c.bf16 %v519, %v515
        %v575 = vpack.c.bf16 %v567, %v564
        %vm576 = vcmask 261120
        %v578 = vsel %vm576, %v570, 0
        %v581 = vsel %vm576, %v571, 0
        %583 = vmatprep.subr.bf16.mxu0 0
        %584 = vmatpush1.bf16.xpose.msra.mxu0 0
        %585 = vmatprep.subr.bf16.mxu0 0
        %586 = vmatpush1.bf16.xpose.msra.mxu0 0
        %587 = vmatprep.subr.bf16.mxu0 0
        %588 = vmatpush1.bf16.xpose.msra.mxu0 0
        %589 = vmatprep.subr.bf16.mxu0 0
        %590 = vmatpush1.bf16.xpose.msra.mxu0 0
        %591 = vmatprep.subr.bf16.mxu0 0
        %592 = vmatpush1.bf16.xpose.msra.mxu0 0
        %593 = vmatprep.subr.bf16.mxu0 0
        %594 = vmatpush1.bf16.xpose.msra.mxu0 0
        %595 = vmatprep.subr.bf16.mxu0 0
        %596 = vmatpush1.bf16.xpose.msra.mxu0 0
        %597 = vmatprep.subr.bf16.mxu0 0
        %598 = vmatpush1.bf16.xpose.msra.mxu0 %v581
        %599 = vmatprep.subr.bf16.mxu0 0
        %600 = vmatpush2.bf16.xpose.msra.mxu0 0
        %601 = vmatprep.subr.bf16.mxu0 0
        %602 = vmatpush2.bf16.xpose.msra.mxu0 0
        %603 = vmatprep.subr.bf16.mxu0 0
        %604 = vmatpush2.bf16.xpose.msra.mxu0 0
        %605 = vmatprep.subr.bf16.mxu0 0
        %606 = vmatpush2.bf16.xpose.msra.mxu0 0
        %607 = vmatprep.subr.bf16.mxu0 0
        %608 = vmatpush2.bf16.xpose.msra.mxu0 0
        %609 = vmatprep.subr.bf16.mxu0 0
        %610 = vmatpush2.bf16.xpose.msra.mxu0 0
        %611 = vmatprep.subr.bf16.mxu0 0
        %612 = vmatpush2.bf16.xpose.msra.mxu0 0
        %613 = vmatprep.subr.bf16.mxu0 0
        %614 = vmatpush2.bf16.xpose.msra.mxu0 0
        %615 = vmatprep.mubr.bf16.mxu0 0
        %616 = vmatmul.mubr.bf16.gmra.mxu0 %v578
        %v617 = vpop.f32.mrf.mxu0
        %v618 = vadd.f32 0.0, %v617
        %v619 = vpop.f32.mrf.mxu0
        %v620 = vpop.f32.mrf.mxu0
        %v621 = vadd.f32 0.0, %v620
        %v622 = vpop.f32.mrf.mxu0
        %623 = vdwg.mxu0
        %v624 = vmul.f32 %v618, 0.17677669
        %v625 = vmul.f32 %v621, 0.17677669
        %vm626 = vcmask 130048
        %v627 = vsel %vm626, %v624, -inf
        %628 = vmax.xlane.f32.xlu0 %v627
        %v629 = vpop.xlane.xlu0 %628
        %v630 = vsel %vm626, %v625, -inf
        %631 = vmax.xlane.f32.xlu0 %v630
        %v632 = vpop.xlane.xlu0 %631
        %v633 = vsub.f32 %v624, %v629
        %v634 = vsub.f32 %v625, %v632
        %v635 = vmul.f32 %v633, 1.442695
        %v636 = vpow.pop %v635
        %v637 = vmul.f32 %v634, 1.442695
        %v638 = vpow.pop %v637
        %v639 = vsel %vm626, %v636, 0.0
        %640 = vadd.xlane.f32.xlu0 %v639
        %v641 = vpop.xlane.xlu0 %640
        %v642 = vsel %vm626, %v638, 0.0
        %643 = vadd.xlane.f32.xlu0 %v642
        %v644 = vpop.xlane.xlu0 %643
        %v645 = vrcp.pop %v641
        %v646 = vrcp.pop %v644
        %v647 = vmul.f32 %v636, %v645
        %v648 = vmul.f32 %v638, %v646
        %v649 = vpack.c.bf16 %v648, %v647
        %v651 = vsel %vm626, %v649, 0
        %653 = vmatprep.subr.bf16.mxu0 0
        %654 = vmatpush1.bf16.msra.mxu0 0
        %655 = vmatprep.subr.bf16.mxu0 0
        %656 = vmatpush1.bf16.msra.mxu0 0
        %657 = vmatprep.subr.bf16.mxu0 0
        %658 = vmatpush1.bf16.msra.mxu0 0
        %659 = vmatprep.subr.bf16.mxu0 0
        %660 = vmatpush1.bf16.msra.mxu0 0
        %661 = vmatprep.subr.bf16.mxu0 0
        %662 = vmatpush1.bf16.msra.mxu0 0
        %663 = vmatprep.subr.bf16.mxu0 0
        %664 = vmatpush1.bf16.msra.mxu0 0
        %665 = vmatprep.subr.bf16.mxu0 0
        %666 = vmatpush1.bf16.msra.mxu0 0
        %667 = vmatprep.subr.bf16.mxu0 0
        %668 = vmatpush1.bf16.msra.mxu0 %v572
        %669 = vmatprep.subr.bf16.mxu0 0
        %670 = vmatpush2.bf16.msra.mxu0 0
        %671 = vmatprep.subr.bf16.mxu0 0
        %672 = vmatpush2.bf16.msra.mxu0 0
        %673 = vmatprep.subr.bf16.mxu0 0
        %674 = vmatpush2.bf16.msra.mxu0 0
        %675 = vmatprep.subr.bf16.mxu0 0
        %676 = vmatpush2.bf16.msra.mxu0 0
        %677 = vmatprep.subr.bf16.mxu0 0
        %678 = vmatpush2.bf16.msra.mxu0 0
        %679 = vmatprep.subr.bf16.mxu0 0
        %680 = vmatpush2.bf16.msra.mxu0 0
        %681 = vmatprep.subr.bf16.mxu0 0
        %682 = vmatpush2.bf16.msra.mxu0 0
        %683 = vmatprep.subr.bf16.mxu0 0
        %684 = vmatpush2.bf16.msra.mxu0 0
        %685 = vmatprep.mubr.bf16.mxu0 0
        %686 = vmatmul.mubr.bf16.gmra.mxu0 %v651
        %v687 = vpop.f32.mrf.mxu0
        %v688 = vadd.f32 0.0, %v687
        %v689 = vpop.f32.mrf.mxu0
        %v690 = vpop.f32.mrf.mxu0
        %v691 = vadd.f32 0.0, %v690
        %v692 = vpop.f32.mrf.mxu0
        %693 = vdwg.mxu0
        %v694 = vpack.c.bf16 %v691, %v688
        %v696 = vunpack.c.l.b16 %v694
        %v697 = vunpack.c.h.b16 %v694
        %v698 = vpack.c.b16 %v696, %v696
        %v699 = vpack.c.b16 %v697, %v697
        %vm702 = vcmask 257024
        %703 = vst.msk [vmem:[#allocation2] sm:$0xf] %vm702, %v698
        %704 = vst.msk [vmem:[#allocation2 + $0x4] sm:$0xf] %vm702, %v699
        %706 = vrot.lane.b32.xlu0 %v570, 96
        %v707 = vpop.permute.xlu0 %706
        %709 = vrot.lane.b32.xlu0 %v571, 96
        %v710 = vpop.permute.xlu0 %709
        %v712 = vsel %vm576, %v707, 0
        %v715 = vsel %vm576, %v710, 0
        %717 = vmatprep.subr.bf16.mxu0 0
        %718 = vmatpush1.bf16.xpose.msra.mxu0 0
        %719 = vmatprep.subr.bf16.mxu0 0
        %720 = vmatpush1.bf16.xpose.msra.mxu0 0
        %721 = vmatprep.subr.bf16.mxu0 0
        %722 = vmatpush1.bf16.xpose.msra.mxu0 0
        %723 = vmatprep.subr.bf16.mxu0 0
        %724 = vmatpush1.bf16.xpose.msra.mxu0 0
        %725 = vmatprep.subr.bf16.mxu0 0
        %726 = vmatpush1.bf16.xpose.msra.mxu0 0
        %727 = vmatprep.subr.bf16.mxu0 0
        %728 = vmatpush1.bf16.xpose.msra.mxu0 0
        %729 = vmatprep.subr.bf16.mxu0 0
        %730 = vmatpush1.bf16.xpose.msra.mxu0 0
        %731 = vmatprep.subr.bf16.mxu0 0
        %732 = vmatpush1.bf16.xpose.msra.mxu0 %v715
        %733 = vmatprep.subr.bf16.mxu0 0
        %734 = vmatpush2.bf16.xpose.msra.mxu0 0
        %735 = vmatprep.subr.bf16.mxu0 0
        %736 = vmatpush2.bf16.xpose.msra.mxu0 0
        %737 = vmatprep.subr.bf16.mxu0 0
        %738 = vmatpush2.bf16.xpose.msra.mxu0 0
        %739 = vmatprep.subr.bf16.mxu0 0
        %740 = vmatpush2.bf16.xpose.msra.mxu0 0
        %741 = vmatprep.subr.bf16.mxu0 0
        %742 = vmatpush2.bf16.xpose.msra.mxu0 0
        %743 = vmatprep.subr.bf16.mxu0 0
        %744 = vmatpush2.bf16.xpose.msra.mxu0 0
        %745 = vmatprep.subr.bf16.mxu0 0
        %746 = vmatpush2.bf16.xpose.msra.mxu0 0
        %747 = vmatprep.subr.bf16.mxu0 0
        %748 = vmatpush2.bf16.xpose.msra.mxu0 0
        %749 = vmatprep.mubr.bf16.mxu0 0
        %750 = vmatmul.mubr.bf16.gmra.mxu0 %v712
        %v751 = vpop.f32.mrf.mxu0
        %v752 = vadd.f32 0.0, %v751
        %v753 = vpop.f32.mrf.mxu0
        %v754 = vpop.f32.mrf.mxu0
        %v755 = vadd.f32 0.0, %v754
        %v756 = vpop.f32.mrf.mxu0
        %757 = vdwg.mxu0
        %v758 = vmul.f32 %v752, 0.17677669
        %v759 = vmul.f32 %v755, 0.17677669
        %v760 = vsel %vm626, %v758, -inf
        %761 = vmax.xlane.f32.xlu0 %v760
        %v762 = vpop.xlane.xlu0 %761
        %v763 = vsel %vm626, %v759, -inf
        %764 = vmax.xlane.f32.xlu0 %v763
        %v765 = vpop.xlane.xlu0 %764
        %v766 = vsub.f32 %v758, %v762
        %v767 = vsub.f32 %v759, %v765
        %v768 = vmul.f32 %v766, 1.442695
        %v769 = vpow.pop %v768
        %v770 = vmul.f32 %v767, 1.442695
        %v771 = vpow.pop %v770
        %v772 = vsel %vm626, %v769, 0.0
        %773 = vadd.xlane.f32.xlu0 %v772
        %v774 = vpop.xlane.xlu0 %773
        %v775 = vsel %vm626, %v771, 0.0
        %776 = vadd.xlane.f32.xlu0 %v775
        %v777 = vpop.xlane.xlu0 %776
        %v778 = vrcp.pop %v774
        %v779 = vrcp.pop %v777
        %v780 = vmul.f32 %v769, %v778
        %v781 = vmul.f32 %v771, %v779
        %v782 = vpack.c.bf16 %v781, %v780
        %784 = vrot.lane.b32.xlu0 %v572, 96
        %v785 = vpop.permute.xlu0 %784
        %v788 = vsel %vm626, %v782, 0
        %790 = vmatprep.subr.bf16.mxu0 0
        %791 = vmatpush1.bf16.msra.mxu0 0
        %792 = vmatprep.subr.bf16.mxu0 0
        %793 = vmatpush1.bf16.msra.mxu0 0
        %794 = vmatprep.subr.bf16.mxu0 0
        %795 = vmatpush1.bf16.msra.mxu0 0
        %796 = vmatprep.subr.bf16.mxu0 0
        %797 = vmatpush1.bf16.msra.mxu0 0
        %798 = vmatprep.subr.bf16.mxu0 0
        %799 = vmatpush1.bf16.msra.mxu0 0
        %800 = vmatprep.subr.bf16.mxu0 0
        %801 = vmatpush1.bf16.msra.mxu0 0
        %802 = vmatprep.subr.bf16.mxu0 0
        %803 = vmatpush1.bf16.msra.mxu0 0
        %804 = vmatprep.subr.bf16.mxu0 0
        %805 = vmatpush1.bf16.msra.mxu0 %v785
        %806 = vmatprep.subr.bf16.mxu0 0
        %807 = vmatpush2.bf16.msra.mxu0 0
        %808 = vmatprep.subr.bf16.mxu0 0
        %809 = vmatpush2.bf16.msra.mxu0 0
        %810 = vmatprep.subr.bf16.mxu0 0
        %811 = vmatpush2.bf16.msra.mxu0 0
        %812 = vmatprep.subr.bf16.mxu0 0
        %813 = vmatpush2.bf16.msra.mxu0 0
        %814 = vmatprep.subr.bf16.mxu0 0
        %815 = vmatpush2.bf16.msra.mxu0 0
        %816 = vmatprep.subr.bf16.mxu0 0
        %817 = vmatpush2.bf16.msra.mxu0 0
        %818 = vmatprep.subr.bf16.mxu0 0
        %819 = vmatpush2.bf16.msra.mxu0 0
        %820 = vmatprep.subr.bf16.mxu0 0
        %821 = vmatpush2.bf16.msra.mxu0 0
        %822 = vmatprep.mubr.bf16.mxu0 0
        %823 = vmatmul.mubr.bf16.gmra.mxu0 %v788
        %v824 = vpop.f32.mrf.mxu0
        %v825 = vadd.f32 0.0, %v824
        %v826 = vpop.f32.mrf.mxu0
        %v827 = vpop.f32.mrf.mxu0
        %v828 = vadd.f32 0.0, %v827
        %v829 = vpop.f32.mrf.mxu0
        %830 = vdwg.mxu0
        %v831 = vpack.c.bf16 %v828, %v825
        %v833 = vunpack.c.l.b16 %v831
        %v834 = vunpack.c.h.b16 %v831
        %v835 = vpack.c.b16 %v833, %v833
        %v836 = vpack.c.b16 %v834, %v834
        %837 = vrot.lane.b32.xlu0 %v835, 32
        %v838 = vpop.permute.xlu0 %837
        %839 = vrot.lane.b32.xlu0 %v836, 32
        %v840 = vpop.permute.xlu0 %839
        %vm843 = vcmask 519424
        %844 = vst.msk [vmem:[#allocation2] sm:$0xf] %vm843, %v838
        %845 = vst.msk [vmem:[#allocation2 + $0x4] sm:$0xf] %vm843, %v840
        %846 = vrot.lane.b32.xlu0 %v570, 64
        %v847 = vpop.permute.xlu0 %846
        %848 = vrot.lane.b32.xlu0 %v571, 64
        %v849 = vpop.permute.xlu0 %848
        %v851 = vsel %vm576, %v847, 0
        %v854 = vsel %vm576, %v849, 0
        %856 = vmatprep.subr.bf16.mxu0 0
        %857 = vmatpush1.bf16.xpose.msra.mxu0 0
        %858 = vmatprep.subr.bf16.mxu0 0
        %859 = vmatpush1.bf16.xpose.msra.mxu0 0
        %860 = vmatprep.subr.bf16.mxu0 0
        %861 = vmatpush1.bf16.xpose.msra.mxu0 0
        %862 = vmatprep.subr.bf16.mxu0 0
        %863 = vmatpush1.bf16.xpose.msra.mxu0 0
        %864 = vmatprep.subr.bf16.mxu0 0
        %865 = vmatpush1.bf16.xpose.msra.mxu0 0
        %866 = vmatprep.subr.bf16.mxu0 0
        %867 = vmatpush1.bf16.xpose.msra.mxu0 0
        %868 = vmatprep.subr.bf16.mxu0 0
        %869 = vmatpush1.bf16.xpose.msra.mxu0 0
        %870 = vmatprep.subr.bf16.mxu0 0
        %871 = vmatpush1.bf16.xpose.msra.mxu0 %v854
        %872 = vmatprep.subr.bf16.mxu0 0
        %873 = vmatpush2.bf16.xpose.msra.mxu0 0
        %874 = vmatprep.subr.bf16.mxu0 0
        %875 = vmatpush2.bf16.xpose.msra.mxu0 0
        %876 = vmatprep.subr.bf16.mxu0 0
        %877 = vmatpush2.bf16.xpose.msra.mxu0 0
        %878 = vmatprep.subr.bf16.mxu0 0
        %879 = vmatpush2.bf16.xpose.msra.mxu0 0
        %880 = vmatprep.subr.bf16.mxu0 0
        %881 = vmatpush2.bf16.xpose.msra.mxu0 0
        %882 = vmatprep.subr.bf16.mxu0 0
        %883 = vmatpush2.bf16.xpose.msra.mxu0 0
        %884 = vmatprep.subr.bf16.mxu0 0
        %885 = vmatpush2.bf16.xpose.msra.mxu0 0
        %886 = vmatprep.subr.bf16.mxu0 0
        %887 = vmatpush2.bf16.xpose.msra.mxu0 0
        %888 = vmatprep.mubr.bf16.mxu0 0
        %889 = vmatmul.mubr.bf16.gmra.mxu0 %v851
        %v890 = vpop.f32.mrf.mxu0
        %v891 = vadd.f32 0.0, %v890
        %v892 = vpop.f32.mrf.mxu0
        %v893 = vpop.f32.mrf.mxu0
        %v894 = vadd.f32 0.0, %v893
        %v895 = vpop.f32.mrf.mxu0
        %896 = vdwg.mxu0
        %v897 = vmul.f32 %v891, 0.17677669
        %v898 = vmul.f32 %v894, 0.17677669
        %v899 = vsel %vm626, %v897, -inf
        %900 = vmax.xlane.f32.xlu0 %v899
        %v901 = vpop.xlane.xlu0 %900
        %v902 = vsel %vm626, %v898, -inf
        %903 = vmax.xlane.f32.xlu0 %v902
        %v904 = vpop.xlane.xlu0 %903
        %v905 = vsub.f32 %v897, %v901
        %v906 = vsub.f32 %v898, %v904
        %v907 = vmul.f32 %v905, 1.442695
        %v908 = vpow.pop %v907
        %v909 = vmul.f32 %v906, 1.442695
        %v910 = vpow.pop %v909
        %v911 = vsel %vm626, %v908, 0.0
        %912 = vadd.xlane.f32.xlu0 %v911
        %v913 = vpop.xlane.xlu0 %912
        %v914 = vsel %vm626, %v910, 0.0
        %915 = vadd.xlane.f32.xlu0 %v914
        %v916 = vpop.xlane.xlu0 %915
        %v917 = vrcp.pop %v913
        %v918 = vrcp.pop %v916
        %v919 = vmul.f32 %v908, %v917
        %v920 = vmul.f32 %v910, %v918
        %v921 = vpack.c.bf16 %v920, %v919
        %922 = vrot.lane.b32.xlu0 %v572, 64
        %v923 = vpop.permute.xlu0 %922
        %v926 = vsel %vm626, %v921, 0
        %928 = vmatprep.subr.bf16.mxu0 0
        %929 = vmatpush1.bf16.msra.mxu0 0
        %930 = vmatprep.subr.bf16.mxu0 0
        %931 = vmatpush1.bf16.msra.mxu0 0
        %932 = vmatprep.subr.bf16.mxu0 0
        %933 = vmatpush1.bf16.msra.mxu0 0
        %934 = vmatprep.subr.bf16.mxu0 0
        %935 = vmatpush1.bf16.msra.mxu0 0
        %936 = vmatprep.subr.bf16.mxu0 0
        %937 = vmatpush1.bf16.msra.mxu0 0
        %938 = vmatprep.subr.bf16.mxu0 0
        %939 = vmatpush1.bf16.msra.mxu0 0
        %940 = vmatprep.subr.bf16.mxu0 0
        %941 = vmatpush1.bf16.msra.mxu0 0
        %942 = vmatprep.subr.bf16.mxu0 0
        %943 = vmatpush1.bf16.msra.mxu0 %v923
        %944 = vmatprep.subr.bf16.mxu0 0
        %945 = vmatpush2.bf16.msra.mxu0 0
        %946 = vmatprep.subr.bf16.mxu0 0
        %947 = vmatpush2.bf16.msra.mxu0 0
        %948 = vmatprep.subr.bf16.mxu0 0
        %949 = vmatpush2.bf16.msra.mxu0 0
        %950 = vmatprep.subr.bf16.mxu0 0
        %951 = vmatpush2.bf16.msra.mxu0 0
        %952 = vmatprep.subr.bf16.mxu0 0
        %953 = vmatpush2.bf16.msra.mxu0 0
        %954 = vmatprep.subr.bf16.mxu0 0
        %955 = vmatpush2.bf16.msra.mxu0 0
        %956 = vmatprep.subr.bf16.mxu0 0
        %957 = vmatpush2.bf16.msra.mxu0 0
        %958 = vmatprep.subr.bf16.mxu0 0
        %959 = vmatpush2.bf16.msra.mxu0 0
        %960 = vmatprep.mubr.bf16.mxu0 0
        %961 = vmatmul.mubr.bf16.gmra.mxu0 %v926
        %v962 = vpop.f32.mrf.mxu0
        %v963 = vadd.f32 0.0, %v962
        %v964 = vpop.f32.mrf.mxu0
        %v965 = vpop.f32.mrf.mxu0
        %v966 = vadd.f32 0.0, %v965
        %v967 = vpop.f32.mrf.mxu0
        %968 = vdwg.mxu0
        %v969 = vpack.c.bf16 %v966, %v963
        %v971 = vunpack.c.l.b16 %v969
        %v972 = vunpack.c.h.b16 %v969
        %v973 = vpack.c.b16 %v971, %v971
        %v974 = vpack.c.b16 %v972, %v972
        %975 = vrot.lane.b32.xlu0 %v973, 64
        %v976 = vpop.permute.xlu0 %975
        %977 = vrot.lane.b32.xlu0 %v974, 64
        %v978 = vpop.permute.xlu0 %977
        %vm981 = vcmask 781824
        %982 = vst.msk [vmem:[#allocation2] sm:$0xf] %vm981, %v976
        %983 = vst.msk [vmem:[#allocation2 + $0x4] sm:$0xf] %vm981, %v978
        %984 = vrot.lane.b32.xlu0 %v570, 32
        %v985 = vpop.permute.xlu0 %984
        %986 = vrot.lane.b32.xlu0 %v571, 32
        %v987 = vpop.permute.xlu0 %986
        %v989 = vsel %vm576, %v985, 0
        %v992 = vsel %vm576, %v987, 0
        %994 = vmatprep.subr.bf16.mxu0 0
        %995 = vmatpush1.bf16.xpose.msra.mxu0 0
        %996 = vmatprep.subr.bf16.mxu0 0
        %997 = vmatpush1.bf16.xpose.msra.mxu0 0
        %998 = vmatprep.subr.bf16.mxu0 0
        %999 = vmatpush1.bf16.xpose.msra.mxu0 0
        %1000 = vmatprep.subr.bf16.mxu0 0
        %1001 = vmatpush1.bf16.xpose.msra.mxu0 0
        %1002 = vmatprep.subr.bf16.mxu0 0
        %1003 = vmatpush1.bf16.xpose.msra.mxu0 0
        %1004 = vmatprep.subr.bf16.mxu0 0
        %1005 = vmatpush1.bf16.xpose.msra.mxu0 0
        %1006 = vmatprep.subr.bf16.mxu0 0
        %1007 = vmatpush1.bf16.xpose.msra.mxu0 0
        %1008 = vmatprep.subr.bf16.mxu0 0
        %1009 = vmatpush1.bf16.xpose.msra.mxu0 %v992
        %1010 = vmatprep.subr.bf16.mxu0 0
        %1011 = vmatpush2.bf16.xpose.msra.mxu0 0
        %1012 = vmatprep.subr.bf16.mxu0 0
        %1013 = vmatpush2.bf16.xpose.msra.mxu0 0
        %1014 = vmatprep.subr.bf16.mxu0 0
        %1015 = vmatpush2.bf16.xpose.msra.mxu0 0
        %1016 = vmatprep.subr.bf16.mxu0 0
        %1017 = vmatpush2.bf16.xpose.msra.mxu0 0
        %1018 = vmatprep.subr.bf16.mxu0 0
        %1019 = vmatpush2.bf16.xpose.msra.mxu0 0
        %1020 = vmatprep.subr.bf16.mxu0 0
        %1021 = vmatpush2.bf16.xpose.msra.mxu0 0
        %1022 = vmatprep.subr.bf16.mxu0 0
        %1023 = vmatpush2.bf16.xpose.msra.mxu0 0
        %1024 = vmatprep.subr.bf16.mxu0 0
        %1025 = vmatpush2.bf16.xpose.msra.mxu0 0
        %1026 = vmatprep.mubr.bf16.mxu0 0
        %1027 = vmatmul.mubr.bf16.gmra.mxu0 %v989
        %v1028 = vpop.f32.mrf.mxu0
        %v1029 = vadd.f32 0.0, %v1028
        %v1030 = vpop.f32.mrf.mxu0
        %v1031 = vpop.f32.mrf.mxu0
        %v1032 = vadd.f32 0.0, %v1031
        %v1033 = vpop.f32.mrf.mxu0
        %1034 = vdwg.mxu0
        %v1035 = vmul.f32 %v1029, 0.17677669
        %v1036 = vmul.f32 %v1032, 0.17677669
        %v1037 = vsel %vm626, %v1035, -inf
        %1038 = vmax.xlane.f32.xlu0 %v1037
        %v1039 = vpop.xlane.xlu0 %1038
        %v1040 = vsel %vm626, %v1036, -inf
        %1041 = vmax.xlane.f32.xlu0 %v1040
        %v1042 = vpop.xlane.xlu0 %1041
        %v1043 = vsub.f32 %v1035, %v1039
        %v1044 = vsub.f32 %v1036, %v1042
        %v1045 = vmul.f32 %v1043, 1.442695
        %v1046 = vpow.pop %v1045
        %v1047 = vmul.f32 %v1044, 1.442695
        %v1048 = vpow.pop %v1047
        %v1049 = vsel %vm626, %v1046, 0.0
        %1050 = vadd.xlane.f32.xlu0 %v1049
        %v1051 = vpop.xlane.xlu0 %1050
        %v1052 = vsel %vm626, %v1048, 0.0
        %1053 = vadd.xlane.f32.xlu0 %v1052
        %v1054 = vpop.xlane.xlu0 %1053
        %v1055 = vrcp.pop %v1051
        %v1056 = vrcp.pop %v1054
        %v1057 = vmul.f32 %v1046, %v1055
        %v1058 = vmul.f32 %v1048, %v1056
        %v1059 = vpack.c.bf16 %v1058, %v1057
        %1060 = vrot.lane.b32.xlu0 %v572, 32
        %v1061 = vpop.permute.xlu0 %1060
        %v1064 = vsel %vm626, %v1059, 0
        %1066 = vmatprep.subr.bf16.mxu0 0
        %1067 = vmatpush1.bf16.msra.mxu0 0
        %1068 = vmatprep.subr.bf16.mxu0 0
        %1069 = vmatpush1.bf16.msra.mxu0 0
        %1070 = vmatprep.subr.bf16.mxu0 0
        %1071 = vmatpush1.bf16.msra.mxu0 0
        %1072 = vmatprep.subr.bf16.mxu0 0
        %1073 = vmatpush1.bf16.msra.mxu0 0
        %1074 = vmatprep.subr.bf16.mxu0 0
        %1075 = vmatpush1.bf16.msra.mxu0 0
        %1076 = vmatprep.subr.bf16.mxu0 0
        %1077 = vmatpush1.bf16.msra.mxu0 0
        %1078 = vmatprep.subr.bf16.mxu0 0
        %1079 = vmatpush1.bf16.msra.mxu0 0
        %1080 = vmatprep.subr.bf16.mxu0 0
        %1081 = vmatpush1.bf16.msra.mxu0 %v1061
        %1082 = vmatprep.subr.bf16.mxu0 0
        %1083 = vmatpush2.bf16.msra.mxu0 0
        %1084 = vmatprep.subr.bf16.mxu0 0
        %1085 = vmatpush2.bf16.msra.mxu0 0
        %1086 = vmatprep.subr.bf16.mxu0 0
        %1087 = vmatpush2.bf16.msra.mxu0 0
        %1088 = vmatprep.subr.bf16.mxu0 0
        %1089 = vmatpush2.bf16.msra.mxu0 0
        %1090 = vmatprep.subr.bf16.mxu0 0
        %1091 = vmatpush2.bf16.msra.mxu0 0
        %1092 = vmatprep.subr.bf16.mxu0 0
        %1093 = vmatpush2.bf16.msra.mxu0 0
        %1094 = vmatprep.subr.bf16.mxu0 0
        %1095 = vmatpush2.bf16.msra.mxu0 0
        %1096 = vmatprep.subr.bf16.mxu0 0
        %1097 = vmatpush2.bf16.msra.mxu0 0
        %1098 = vmatprep.mubr.bf16.mxu0 0
        %1099 = vmatmul.mubr.bf16.gmra.mxu0 %v1064
        %v1100 = vpop.f32.mrf.mxu0
        %v1101 = vadd.f32 0.0, %v1100
        %v1102 = vpop.f32.mrf.mxu0
        %v1103 = vpop.f32.mrf.mxu0
        %v1104 = vadd.f32 0.0, %v1103
        %v1105 = vpop.f32.mrf.mxu0
        %1106 = vdwg.mxu0
        %v1107 = vpack.c.bf16 %v1104, %v1101
        %v1109 = vunpack.c.l.b16 %v1107
        %v1110 = vunpack.c.h.b16 %v1107
        %v1111 = vpack.c.b16 %v1109, %v1109
        %v1112 = vpack.c.b16 %v1110, %v1110
        %1113 = vrot.lane.b32.xlu0 %v1111, 96
        %v1114 = vpop.permute.xlu0 %1113
        %1115 = vrot.lane.b32.xlu0 %v1112, 96
        %v1116 = vpop.permute.xlu0 %1115
        %vm1119 = vcmask 1044224
        %1120 = vst.msk [vmem:[#allocation2] sm:$0xf] %vm1119, %v1114
        %1121 = vst.msk [vmem:[#allocation2 + $0x4] sm:$0xf] %vm1119, %v1116
        %v1123 = vsel %vm576, %v573, 0
        %v1126 = vsel %vm576, %v574, 0
        %1128 = vmatprep.subr.bf16.mxu0 0
        %1129 = vmatpush1.bf16.xpose.msra.mxu0 0
        %1130 = vmatprep.subr.bf16.mxu0 0
        %1131 = vmatpush1.bf16.xpose.msra.mxu0 0
        %1132 = vmatprep.subr.bf16.mxu0 0
        %1133 = vmatpush1.bf16.xpose.msra.mxu0 0
        %1134 = vmatprep.subr.bf16.mxu0 0
        %1135 = vmatpush1.bf16.xpose.msra.mxu0 0
        %1136 = vmatprep.subr.bf16.mxu0 0
        %1137 = vmatpush1.bf16.xpose.msra.mxu0 0
        %1138 = vmatprep.subr.bf16.mxu0 0
        %1139 = vmatpush1.bf16.xpose.msra.mxu0 0
        %1140 = vmatprep.subr.bf16.mxu0 0
        %1141 = vmatpush1.bf16.xpose.msra.mxu0 0
        %1142 = vmatprep.subr.bf16.mxu0 0
        %1143 = vmatpush1.bf16.xpose.msra.mxu0 %v1126
        %1144 = vmatprep.subr.bf16.mxu0 0
        %1145 = vmatpush2.bf16.xpose.msra.mxu0 0
        %1146 = vmatprep.subr.bf16.mxu0 0
        %1147 = vmatpush2.bf16.xpose.msra.mxu0 0
        %1148 = vmatprep.subr.bf16.mxu0 0
        %1149 = vmatpush2.bf16.xpose.msra.mxu0 0
        %1150 = vmatprep.subr.bf16.mxu0 0
        %1151 = vmatpush2.bf16.xpose.msra.mxu0 0
        %1152 = vmatprep.subr.bf16.mxu0 0
        %1153 = vmatpush2.bf16.xpose.msra.mxu0 0
        %1154 = vmatprep.subr.bf16.mxu0 0
        %1155 = vmatpush2.bf16.xpose.msra.mxu0 0
        %1156 = vmatprep.subr.bf16.mxu0 0
        %1157 = vmatpush2.bf16.xpose.msra.mxu0 0
        %1158 = vmatprep.subr.bf16.mxu0 0
        %1159 = vmatpush2.bf16.xpose.msra.mxu0 0
        %1160 = vmatprep.mubr.bf16.mxu0 0
        %1161 = vmatmul.mubr.bf16.gmra.mxu0 %v1123
        %v1162 = vpop.f32.mrf.mxu0
        %v1163 = vadd.f32 0.0, %v1162
        %v1164 = vpop.f32.mrf.mxu0
        %v1165 = vpop.f32.mrf.mxu0
        %v1166 = vadd.f32 0.0, %v1165
        %v1167 = vpop.f32.mrf.mxu0
        %1168 = vdwg.mxu0
        %v1169 = vmul.f32 %v1163, 0.17677669
        %v1170 = vmul.f32 %v1166, 0.17677669
        %v1171 = vsel %vm626, %v1169, -inf
        %1172 = vmax.xlane.f32.xlu0 %v1171
        %v1173 = vpop.xlane.xlu0 %1172
        %v1174 = vsel %vm626, %v1170, -inf
        %1175 = vmax.xlane.f32.xlu0 %v1174
        %v1176 = vpop.xlane.xlu0 %1175
        %v1177 = vsub.f32 %v1169, %v1173
        %v1178 = vsub.f32 %v1170, %v1176
        %v1179 = vmul.f32 %v1177, 1.442695
        %v1180 = vpow.pop %v1179
        %v1181 = vmul.f32 %v1178, 1.442695
        %v1182 = vpow.pop %v1181
        %v1183 = vsel %vm626, %v1180, 0.0
        %1184 = vadd.xlane.f32.xlu0 %v1183
        %v1185 = vpop.xlane.xlu0 %1184
        %v1186 = vsel %vm626, %v1182, 0.0
        %1187 = vadd.xlane.f32.xlu0 %v1186
        %v1188 = vpop.xlane.xlu0 %1187
        %v1189 = vrcp.pop %v1185
        %v1190 = vrcp.pop %v1188
        %v1191 = vmul.f32 %v1180, %v1189
        %v1192 = vmul.f32 %v1182, %v1190
        %v1193 = vpack.c.bf16 %v1192, %v1191
        %v1195 = vsel %vm626, %v1193, 0
        %1197 = vmatprep.subr.bf16.mxu0 0
        %1198 = vmatpush1.bf16.msra.mxu0 0
        %1199 = vmatprep.subr.bf16.mxu0 0
        %1200 = vmatpush1.bf16.msra.mxu0 0
        %1201 = vmatprep.subr.bf16.mxu0 0
        %1202 = vmatpush1.bf16.msra.mxu0 0
        %1203 = vmatprep.subr.bf16.mxu0 0
        %1204 = vmatpush1.bf16.msra.mxu0 0
        %1205 = vmatprep.subr.bf16.mxu0 0
        %1206 = vmatpush1.bf16.msra.mxu0 0
        %1207 = vmatprep.subr.bf16.mxu0 0
        %1208 = vmatpush1.bf16.msra.mxu0 0
        %1209 = vmatprep.subr.bf16.mxu0 0
        %1210 = vmatpush1.bf16.msra.mxu0 0
        %1211 = vmatprep.subr.bf16.mxu0 0
        %1212 = vmatpush1.bf16.msra.mxu0 %v575
        %1213 = vmatprep.subr.bf16.mxu0 0
        %1214 = vmatpush2.bf16.msra.mxu0 0
        %1215 = vmatprep.subr.bf16.mxu0 0
        %1216 = vmatpush2.bf16.msra.mxu0 0
        %1217 = vmatprep.subr.bf16.mxu0 0
        %1218 = vmatpush2.bf16.msra.mxu0 0
        %1219 = vmatprep.subr.bf16.mxu0 0
        %1220 = vmatpush2.bf16.msra.mxu0 0
        %1221 = vmatprep.subr.bf16.mxu0 0
        %1222 = vmatpush2.bf16.msra.mxu0 0
        %1223 = vmatprep.subr.bf16.mxu0 0
        %1224 = vmatpush2.bf16.msra.mxu0 0
        %1225 = vmatprep.subr.bf16.mxu0 0
        %1226 = vmatpush2.bf16.msra.mxu0 0
        %1227 = vmatprep.subr.bf16.mxu0 0
        %1228 = vmatpush2.bf16.msra.mxu0 0
        %1229 = vmatprep.mubr.bf16.mxu0 0
        %1230 = vmatmul.mubr.bf16.gmra.mxu0 %v1195
        %v1231 = vpop.f32.mrf.mxu0
        %v1232 = vadd.f32 0.0, %v1231
        %v1233 = vpop.f32.mrf.mxu0
        %v1234 = vpop.f32.mrf.mxu0
        %v1235 = vadd.f32 0.0, %v1234
        %v1236 = vpop.f32.mrf.mxu0
        %1237 = vdwg.mxu0
        %v1238 = vpack.c.bf16 %v1235, %v1232
        %v1240 = vunpack.c.l.b16 %v1238
        %v1241 = vunpack.c.h.b16 %v1238
        %v1242 = vpack.c.b16 %v1240, %v1240
        %v1243 = vpack.c.b16 %v1241, %v1241
        %1246 = vst.msk [vmem:[#allocation2 + $0x8] sm:$0xf] %vm702, %v1242
        %1247 = vst.msk [vmem:[#allocation2 + $0xc] sm:$0xf] %vm702, %v1243
        %1249 = vrot.lane.b32.xlu0 %v573, 96
        %v1250 = vpop.permute.xlu0 %1249
        %1252 = vrot.lane.b32.xlu0 %v574, 96
        %v1253 = vpop.permute.xlu0 %1252
        %v1255 = vsel %vm576, %v1250, 0
        %v1258 = vsel %vm576, %v1253, 0
        %1260 = vmatprep.subr.bf16.mxu0 0
        %1261 = vmatpush1.bf16.xpose.msra.mxu0 0
        %1262 = vmatprep.subr.bf16.mxu0 0
        %1263 = vmatpush1.bf16.xpose.msra.mxu0 0
        %1264 = vmatprep.subr.bf16.mxu0 0
        %1265 = vmatpush1.bf16.xpose.msra.mxu0 0
        %1266 = vmatprep.subr.bf16.mxu0 0
        %1267 = vmatpush1.bf16.xpose.msra.mxu0 0
        %1268 = vmatprep.subr.bf16.mxu0 0
        %1269 = vmatpush1.bf16.xpose.msra.mxu0 0
        %1270 = vmatprep.subr.bf16.mxu0 0
        %1271 = vmatpush1.bf16.xpose.msra.mxu0 0
        %1272 = vmatprep.subr.bf16.mxu0 0
        %1273 = vmatpush1.bf16.xpose.msra.mxu0 0
        %1274 = vmatprep.subr.bf16.mxu0 0
        %1275 = vmatpush1.bf16.xpose.msra.mxu0 %v1258
        %1276 = vmatprep.subr.bf16.mxu0 0
        %1277 = vmatpush2.bf16.xpose.msra.mxu0 0
        %1278 = vmatprep.subr.bf16.mxu0 0
        %1279 = vmatpush2.bf16.xpose.msra.mxu0 0
        %1280 = vmatprep.subr.bf16.mxu0 0
        %1281 = vmatpush2.bf16.xpose.msra.mxu0 0
        %1282 = vmatprep.subr.bf16.mxu0 0
        %1283 = vmatpush2.bf16.xpose.msra.mxu0 0
        %1284 = vmatprep.subr.bf16.mxu0 0
        %1285 = vmatpush2.bf16.xpose.msra.mxu0 0
        %1286 = vmatprep.subr.bf16.mxu0 0
        %1287 = vmatpush2.bf16.xpose.msra.mxu0 0
        %1288 = vmatprep.subr.bf16.mxu0 0
        %1289 = vmatpush2.bf16.xpose.msra.mxu0 0
        %1290 = vmatprep.subr.bf16.mxu0 0
        %1291 = vmatpush2.bf16.xpose.msra.mxu0 0
        %1292 = vmatprep.mubr.bf16.mxu0 0
        %1293 = vmatmul.mubr.bf16.gmra.mxu0 %v1255
        %v1294 = vpop.f32.mrf.mxu0
        %v1295 = vadd.f32 0.0, %v1294
        %v1296 = vpop.f32.mrf.mxu0
        %v1297 = vpop.f32.mrf.mxu0
        %v1298 = vadd.f32 0.0, %v1297
        %v1299 = vpop.f32.mrf.mxu0
        %1300 = vdwg.mxu0
        %v1301 = vmul.f32 %v1295, 0.17677669
        %v1302 = vmul.f32 %v1298, 0.17677669
        %v1303 = vsel %vm626, %v1301, -inf
        %1304 = vmax.xlane.f32.xlu0 %v1303
        %v1305 = vpop.xlane.xlu0 %1304
        %v1306 = vsel %vm626, %v1302, -inf
        %1307 = vmax.xlane.f32.xlu0 %v1306
        %v1308 = vpop.xlane.xlu0 %1307
        %v1309 = vsub.f32 %v1301, %v1305
        %v1310 = vsub.f32 %v1302, %v1308
        %v1311 = vmul.f32 %v1309, 1.442695
        %v1312 = vpow.pop %v1311
        %v1313 = vmul.f32 %v1310, 1.442695
        %v1314 = vpow.pop %v1313
        %v1315 = vsel %vm626, %v1312, 0.0
        %1316 = vadd.xlane.f32.xlu0 %v1315
        %v1317 = vpop.xlane.xlu0 %1316
        %v1318 = vsel %vm626, %v1314, 0.0
        %1319 = vadd.xlane.f32.xlu0 %v1318
        %v1320 = vpop.xlane.xlu0 %1319
        %v1321 = vrcp.pop %v1317
        %v1322 = vrcp.pop %v1320
        %v1323 = vmul.f32 %v1312, %v1321
        %v1324 = vmul.f32 %v1314, %v1322
        %v1325 = vpack.c.bf16 %v1324, %v1323
        %1327 = vrot.lane.b32.xlu0 %v575, 96
        %v1328 = vpop.permute.xlu0 %1327
        %v1331 = vsel %vm626, %v1325, 0
        %1333 = vmatprep.subr.bf16.mxu0 0
        %1334 = vmatpush1.bf16.msra.mxu0 0
        %1335 = vmatprep.subr.bf16.mxu0 0
        %1336 = vmatpush1.bf16.msra.mxu0 0
        %1337 = vmatprep.subr.bf16.mxu0 0
        %1338 = vmatpush1.bf16.msra.mxu0 0
        %1339 = vmatprep.subr.bf16.mxu0 0
        %1340 = vmatpush1.bf16.msra.mxu0 0
        %1341 = vmatprep.subr.bf16.mxu0 0
        %1342 = vmatpush1.bf16.msra.mxu0 0
        %1343 = vmatprep.subr.bf16.mxu0 0
        %1344 = vmatpush1.bf16.msra.mxu0 0
        %1345 = vmatprep.subr.bf16.mxu0 0
        %1346 = vmatpush1.bf16.msra.mxu0 0
        %1347 = vmatprep.subr.bf16.mxu0 0
        %1348 = vmatpush1.bf16.msra.mxu0 %v1328
        %1349 = vmatprep.subr.bf16.mxu0 0
        %1350 = vmatpush2.bf16.msra.mxu0 0
        %1351 = vmatprep.subr.bf16.mxu0 0
        %1352 = vmatpush2.bf16.msra.mxu0 0
        %1353 = vmatprep.subr.bf16.mxu0 0
        %1354 = vmatpush2.bf16.msra.mxu0 0
        %1355 = vmatprep.subr.bf16.mxu0 0
        %1356 = vmatpush2.bf16.msra.mxu0 0
        %1357 = vmatprep.subr.bf16.mxu0 0
        %1358 = vmatpush2.bf16.msra.mxu0 0
        %1359 = vmatprep.subr.bf16.mxu0 0
        %1360 = vmatpush2.bf16.msra.mxu0 0
        %1361 = vmatprep.subr.bf16.mxu0 0
        %1362 = vmatpush2.bf16.msra.mxu0 0
        %1363 = vmatprep.subr.bf16.mxu0 0
        %1364 = vmatpush2.bf16.msra.mxu0 0
        %1365 = vmatprep.mubr.bf16.mxu0 0
        %1366 = vmatmul.mubr.bf16.gmra.mxu0 %v1331
        %v1367 = vpop.f32.mrf.mxu0
        %v1368 = vadd.f32 0.0, %v1367
        %v1369 = vpop.f32.mrf.mxu0
        %v1370 = vpop.f32.mrf.mxu0
        %v1371 = vadd.f32 0.0, %v1370
        %v1372 = vpop.f32.mrf.mxu0
        %1373 = vdwg.mxu0
        %v1374 = vpack.c.bf16 %v1371, %v1368
        %v1376 = vunpack.c.l.b16 %v1374
        %v1377 = vunpack.c.h.b16 %v1374
        %v1378 = vpack.c.b16 %v1376, %v1376
        %v1379 = vpack.c.b16 %v1377, %v1377
        %1380 = vrot.lane.b32.xlu0 %v1378, 32
        %v1381 = vpop.permute.xlu0 %1380
        %1382 = vrot.lane.b32.xlu0 %v1379, 32
        %v1383 = vpop.permute.xlu0 %1382
        %1386 = vst.msk [vmem:[#allocation2 + $0x8] sm:$0xf] %vm843, %v1381
        %1387 = vst.msk [vmem:[#allocation2 + $0xc] sm:$0xf] %vm843, %v1383
        %1388 = vrot.lane.b32.xlu0 %v573, 64
        %v1389 = vpop.permute.xlu0 %1388
        %1390 = vrot.lane.b32.xlu0 %v574, 64
        %v1391 = vpop.permute.xlu0 %1390
        %v1393 = vsel %vm576, %v1389, 0
        %v1396 = vsel %vm576, %v1391, 0
        %1398 = vmatprep.subr.bf16.mxu0 0
        %1399 = vmatpush1.bf16.xpose.msra.mxu0 0
        %1400 = vmatprep.subr.bf16.mxu0 0
        %1401 = vmatpush1.bf16.xpose.msra.mxu0 0
        %1402 = vmatprep.subr.bf16.mxu0 0
        %1403 = vmatpush1.bf16.xpose.msra.mxu0 0
        %1404 = vmatprep.subr.bf16.mxu0 0
        %1405 = vmatpush1.bf16.xpose.msra.mxu0 0
        %1406 = vmatprep.subr.bf16.mxu0 0
        %1407 = vmatpush1.bf16.xpose.msra.mxu0 0
        %1408 = vmatprep.subr.bf16.mxu0 0
        %1409 = vmatpush1.bf16.xpose.msra.mxu0 0
        %1410 = vmatprep.subr.bf16.mxu0 0
        %1411 = vmatpush1.bf16.xpose.msra.mxu0 0
        %1412 = vmatprep.subr.bf16.mxu0 0
        %1413 = vmatpush1.bf16.xpose.msra.mxu0 %v1396
        %1414 = vmatprep.subr.bf16.mxu0 0
        %1415 = vmatpush2.bf16.xpose.msra.mxu0 0
        %1416 = vmatprep.subr.bf16.mxu0 0
        %1417 = vmatpush2.bf16.xpose.msra.mxu0 0
        %1418 = vmatprep.subr.bf16.mxu0 0
        %1419 = vmatpush2.bf16.xpose.msra.mxu0 0
        %1420 = vmatprep.subr.bf16.mxu0 0
        %1421 = vmatpush2.bf16.xpose.msra.mxu0 0
        %1422 = vmatprep.subr.bf16.mxu0 0
        %1423 = vmatpush2.bf16.xpose.msra.mxu0 0
        %1424 = vmatprep.subr.bf16.mxu0 0
        %1425 = vmatpush2.bf16.xpose.msra.mxu0 0
        %1426 = vmatprep.subr.bf16.mxu0 0
        %1427 = vmatpush2.bf16.xpose.msra.mxu0 0
        %1428 = vmatprep.subr.bf16.mxu0 0
        %1429 = vmatpush2.bf16.xpose.msra.mxu0 0
        %1430 = vmatprep.mubr.bf16.mxu0 0
        %1431 = vmatmul.mubr.bf16.gmra.mxu0 %v1393
        %v1432 = vpop.f32.mrf.mxu0
        %v1433 = vadd.f32 0.0, %v1432
        %v1434 = vpop.f32.mrf.mxu0
        %v1435 = vpop.f32.mrf.mxu0
        %v1436 = vadd.f32 0.0, %v1435
        %v1437 = vpop.f32.mrf.mxu0
        %1438 = vdwg.mxu0
        %v1439 = vmul.f32 %v1433, 0.17677669
        %v1440 = vmul.f32 %v1436, 0.17677669
        %v1441 = vsel %vm626, %v1439, -inf
        %1442 = vmax.xlane.f32.xlu0 %v1441
        %v1443 = vpop.xlane.xlu0 %1442
        %v1444 = vsel %vm626, %v1440, -inf
        %1445 = vmax.xlane.f32.xlu0 %v1444
        %v1446 = vpop.xlane.xlu0 %1445
        %v1447 = vsub.f32 %v1439, %v1443
        %v1448 = vsub.f32 %v1440, %v1446
        %v1449 = vmul.f32 %v1447, 1.442695
        %v1450 = vpow.pop %v1449
        %v1451 = vmul.f32 %v1448, 1.442695
        %v1452 = vpow.pop %v1451
        %v1453 = vsel %vm626, %v1450, 0.0
        %1454 = vadd.xlane.f32.xlu0 %v1453
        %v1455 = vpop.xlane.xlu0 %1454
        %v1456 = vsel %vm626, %v1452, 0.0
        %1457 = vadd.xlane.f32.xlu0 %v1456
        %v1458 = vpop.xlane.xlu0 %1457
        %v1459 = vrcp.pop %v1455
        %v1460 = vrcp.pop %v1458
        %v1461 = vmul.f32 %v1450, %v1459
        %v1462 = vmul.f32 %v1452, %v1460
        %v1463 = vpack.c.bf16 %v1462, %v1461
        %1464 = vrot.lane.b32.xlu0 %v575, 64
        %v1465 = vpop.permute.xlu0 %1464
        %v1468 = vsel %vm626, %v1463, 0
        %1470 = vmatprep.subr.bf16.mxu0 0
        %1471 = vmatpush1.bf16.msra.mxu0 0
        %1472 = vmatprep.subr.bf16.mxu0 0
        %1473 = vmatpush1.bf16.msra.mxu0 0
        %1474 = vmatprep.subr.bf16.mxu0 0
        %1475 = vmatpush1.bf16.msra.mxu0 0
        %1476 = vmatprep.subr.bf16.mxu0 0
        %1477 = vmatpush1.bf16.msra.mxu0 0
        %1478 = vmatprep.subr.bf16.mxu0 0
        %1479 = vmatpush1.bf16.msra.mxu0 0
        %1480 = vmatprep.subr.bf16.mxu0 0
        %1481 = vmatpush1.bf16.msra.mxu0 0
        %1482 = vmatprep.subr.bf16.mxu0 0
        %1483 = vmatpush1.bf16.msra.mxu0 0
        %1484 = vmatprep.subr.bf16.mxu0 0
        %1485 = vmatpush1.bf16.msra.mxu0 %v1465
        %1486 = vmatprep.subr.bf16.mxu0 0
        %1487 = vmatpush2.bf16.msra.mxu0 0
        %1488 = vmatprep.subr.bf16.mxu0 0
        %1489 = vmatpush2.bf16.msra.mxu0 0
        %1490 = vmatprep.subr.bf16.mxu0 0
        %1491 = vmatpush2.bf16.msra.mxu0 0
        %1492 = vmatprep.subr.bf16.mxu0 0
        %1493 = vmatpush2.bf16.msra.mxu0 0
        %1494 = vmatprep.subr.bf16.mxu0 0
        %1495 = vmatpush2.bf16.msra.mxu0 0
        %1496 = vmatprep.subr.bf16.mxu0 0
        %1497 = vmatpush2.bf16.msra.mxu0 0
        %1498 = vmatprep.subr.bf16.mxu0 0
        %1499 = vmatpush2.bf16.msra.mxu0 0
        %1500 = vmatprep.subr.bf16.mxu0 0
        %1501 = vmatpush2.bf16.msra.mxu0 0
        %1502 = vmatprep.mubr.bf16.mxu0 0
        %1503 = vmatmul.mubr.bf16.gmra.mxu0 %v1468
        %v1504 = vpop.f32.mrf.mxu0
        %v1505 = vadd.f32 0.0, %v1504
        %v1506 = vpop.f32.mrf.mxu0
        %v1507 = vpop.f32.mrf.mxu0
        %v1508 = vadd.f32 0.0, %v1507
        %v1509 = vpop.f32.mrf.mxu0
        %1510 = vdwg.mxu0
        %v1511 = vpack.c.bf16 %v1508, %v1505
        %v1513 = vunpack.c.l.b16 %v1511
        %v1514 = vunpack.c.h.b16 %v1511
        %v1515 = vpack.c.b16 %v1513, %v1513
        %v1516 = vpack.c.b16 %v1514, %v1514
        %1517 = vrot.lane.b32.xlu0 %v1515, 64
        %v1518 = vpop.permute.xlu0 %1517
        %1519 = vrot.lane.b32.xlu0 %v1516, 64
        %v1520 = vpop.permute.xlu0 %1519
        %1523 = vst.msk [vmem:[#allocation2 + $0x8] sm:$0xf] %vm981, %v1518
        %1524 = vst.msk [vmem:[#allocation2 + $0xc] sm:$0xf] %vm981, %v1520
        %1525 = vrot.lane.b32.xlu0 %v573, 32
        %v1526 = vpop.permute.xlu0 %1525
        %1527 = vrot.lane.b32.xlu0 %v574, 32
        %v1528 = vpop.permute.xlu0 %1527
        %v1530 = vsel %vm576, %v1526, 0
        %v1533 = vsel %vm576, %v1528, 0
        %1535 = vmatprep.subr.bf16.mxu0 0
        %1536 = vmatpush1.bf16.xpose.msra.mxu0 0
        %1537 = vmatprep.subr.bf16.mxu0 0
        %1538 = vmatpush1.bf16.xpose.msra.mxu0 0
        %1539 = vmatprep.subr.bf16.mxu0 0
        %1540 = vmatpush1.bf16.xpose.msra.mxu0 0
        %1541 = vmatprep.subr.bf16.mxu0 0
        %1542 = vmatpush1.bf16.xpose.msra.mxu0 0
        %1543 = vmatprep.subr.bf16.mxu0 0
        %1544 = vmatpush1.bf16.xpose.msra.mxu0 0
        %1545 = vmatprep.subr.bf16.mxu0 0
        %1546 = vmatpush1.bf16.xpose.msra.mxu0 0
        %1547 = vmatprep.subr.bf16.mxu0 0
        %1548 = vmatpush1.bf16.xpose.msra.mxu0 0
        %1549 = vmatprep.subr.bf16.mxu0 0
        %1550 = vmatpush1.bf16.xpose.msra.mxu0 %v1533
        %1551 = vmatprep.subr.bf16.mxu0 0
        %1552 = vmatpush2.bf16.xpose.msra.mxu0 0
        %1553 = vmatprep.subr.bf16.mxu0 0
        %1554 = vmatpush2.bf16.xpose.msra.mxu0 0
        %1555 = vmatprep.subr.bf16.mxu0 0
        %1556 = vmatpush2.bf16.xpose.msra.mxu0 0
        %1557 = vmatprep.subr.bf16.mxu0 0
        %1558 = vmatpush2.bf16.xpose.msra.mxu0 0
        %1559 = vmatprep.subr.bf16.mxu0 0
        %1560 = vmatpush2.bf16.xpose.msra.mxu0 0
        %1561 = vmatprep.subr.bf16.mxu0 0
        %1562 = vmatpush2.bf16.xpose.msra.mxu0 0
        %1563 = vmatprep.subr.bf16.mxu0 0
        %1564 = vmatpush2.bf16.xpose.msra.mxu0 0
        %1565 = vmatprep.subr.bf16.mxu0 0
        %1566 = vmatpush2.bf16.xpose.msra.mxu0 0
        %1567 = vmatprep.mubr.bf16.mxu0 0
        %1568 = vmatmul.mubr.bf16.gmra.mxu0 %v1530
        %v1569 = vpop.f32.mrf.mxu0
        %v1570 = vadd.f32 0.0, %v1569
        %v1571 = vpop.f32.mrf.mxu0
        %v1572 = vpop.f32.mrf.mxu0
        %v1573 = vadd.f32 0.0, %v1572
        %v1574 = vpop.f32.mrf.mxu0
        %1575 = vdwg.mxu0
        %v1576 = vmul.f32 %v1570, 0.17677669
        %v1577 = vmul.f32 %v1573, 0.17677669
        %v1578 = vsel %vm626, %v1576, -inf
        %1579 = vmax.xlane.f32.xlu0 %v1578
        %v1580 = vpop.xlane.xlu0 %1579
        %v1581 = vsel %vm626, %v1577, -inf
        %1582 = vmax.xlane.f32.xlu0 %v1581
        %v1583 = vpop.xlane.xlu0 %1582
        %v1584 = vsub.f32 %v1576, %v1580
        %v1585 = vsub.f32 %v1577, %v1583
        %v1586 = vmul.f32 %v1584, 1.442695
        %v1587 = vpow.pop %v1586
        %v1588 = vmul.f32 %v1585, 1.442695
        %v1589 = vpow.pop %v1588
        %v1590 = vsel %vm626, %v1587, 0.0
        %1591 = vadd.xlane.f32.xlu0 %v1590
        %v1592 = vpop.xlane.xlu0 %1591
        %v1593 = vsel %vm626, %v1589, 0.0
        %1594 = vadd.xlane.f32.xlu0 %v1593
        %v1595 = vpop.xlane.xlu0 %1594
        %v1596 = vrcp.pop %v1592
        %v1597 = vrcp.pop %v1595
        %v1598 = vmul.f32 %v1587, %v1596
        %v1599 = vmul.f32 %v1589, %v1597
        %v1600 = vpack.c.bf16 %v1599, %v1598
        %1601 = vrot.lane.b32.xlu0 %v575, 32
        %v1602 = vpop.permute.xlu0 %1601
        %v1605 = vsel %vm626, %v1600, 0
        %1607 = vmatprep.subr.bf16.mxu0 0
        %1608 = vmatpush1.bf16.msra.mxu0 0
        %1609 = vmatprep.subr.bf16.mxu0 0
        %1610 = vmatpush1.bf16.msra.mxu0 0
        %1611 = vmatprep.subr.bf16.mxu0 0
        %1612 = vmatpush1.bf16.msra.mxu0 0
        %1613 = vmatprep.subr.bf16.mxu0 0
        %1614 = vmatpush1.bf16.msra.mxu0 0
        %1615 = vmatprep.subr.bf16.mxu0 0
        %1616 = vmatpush1.bf16.msra.mxu0 0
        %1617 = vmatprep.subr.bf16.mxu0 0
        %1618 = vmatpush1.bf16.msra.mxu0 0
        %1619 = vmatprep.subr.bf16.mxu0 0
        %1620 = vmatpush1.bf16.msra.mxu0 0
        %1621 = vmatprep.subr.bf16.mxu0 0
        %1622 = vmatpush1.bf16.msra.mxu0 %v1602
        %1623 = vmatprep.subr.bf16.mxu0 0
        %1624 = vmatpush2.bf16.msra.mxu0 0
        %1625 = vmatprep.subr.bf16.mxu0 0
        %1626 = vmatpush2.bf16.msra.mxu0 0
        %1627 = vmatprep.subr.bf16.mxu0 0
        %1628 = vmatpush2.bf16.msra.mxu0 0
        %1629 = vmatprep.subr.bf16.mxu0 0
        %1630 = vmatpush2.bf16.msra.mxu0 0
        %1631 = vmatprep.subr.bf16.mxu0 0
        %1632 = vmatpush2.bf16.msra.mxu0 0
        %1633 = vmatprep.subr.bf16.mxu0 0
        %1634 = vmatpush2.bf16.msra.mxu0 0
        %1635 = vmatprep.subr.bf16.mxu0 0
        %1636 = vmatpush2.bf16.msra.mxu0 0
        %1637 = vmatprep.subr.bf16.mxu0 0
        %1638 = vmatpush2.bf16.msra.mxu0 0
        %1639 = vmatprep.mubr.bf16.mxu0 0
        %1640 = vmatmul.mubr.bf16.gmra.mxu0 %v1605
        %v1641 = vpop.f32.mrf.mxu0
        %v1642 = vadd.f32 0.0, %v1641
        %v1643 = vpop.f32.mrf.mxu0
        %v1644 = vpop.f32.mrf.mxu0
        %v1645 = vadd.f32 0.0, %v1644
        %v1646 = vpop.f32.mrf.mxu0
        %1647 = vdwg.mxu0
        %v1648 = vpack.c.bf16 %v1645, %v1642
        %v1650 = vunpack.c.l.b16 %v1648
        %v1651 = vunpack.c.h.b16 %v1648
        %v1652 = vpack.c.b16 %v1650, %v1650
        %v1653 = vpack.c.b16 %v1651, %v1651
        %1654 = vrot.lane.b32.xlu0 %v1652, 96
        %v1655 = vpop.permute.xlu0 %1654
        %1656 = vrot.lane.b32.xlu0 %v1653, 96
        %v1657 = vpop.permute.xlu0 %1656
        %1660 = vst.msk [vmem:[#allocation2 + $0x8] sm:$0xf] %vm1119, %v1655
        %1661 = vst.msk [vmem:[#allocation2 + $0xc] sm:$0xf] %vm1119, %v1657
        %v1662 = vld [vmem:[#allocation2] sm:$0xf]
        %v1663 = vld [vmem:[#allocation2 + $0x4] sm:$0xf]
        %v1664 = vld [vmem:[#allocation2 + $0x8] sm:$0xf]
        %v1665 = vld [vmem:[#allocation2 + $0xc] sm:$0xf]
        %v1666 = vld [vmem:[#allocation8] sm:$0xf]
        %v1667 = vld [vmem:[#allocation8 + $0x4] sm:$0xf]
        %v1668 = vld [vmem:[#allocation8 + $0x8] sm:$0xf]
        %v1669 = vld [vmem:[#allocation8 + $0xc] sm:$0xf]
        %v1670 = vld [vmem:[#allocation8 + $0x10] sm:$0xf]
        %v1671 = vld [vmem:[#allocation8 + $0x14] sm:$0xf]
        %v1672 = vld [vmem:[#allocation8 + $0x18] sm:$0xf]
        %v1673 = vld [vmem:[#allocation8 + $0x1c] sm:$0xf]
        %v1674 = vld [vmem:[#allocation8 + $0x20] sm:$0xf]
        %v1675 = vld [vmem:[#allocation8 + $0x24] sm:$0xf]
        %v1676 = vld [vmem:[#allocation8 + $0x28] sm:$0xf]
        %v1677 = vld [vmem:[#allocation8 + $0x2c] sm:$0xf]
        %v1678 = vld [vmem:[#allocation8 + $0x30] sm:$0xf]
        %v1679 = vld [vmem:[#allocation8 + $0x34] sm:$0xf]
        %v1680 = vld [vmem:[#allocation8 + $0x38] sm:$0xf]
        %v1681 = vld [vmem:[#allocation8 + $0x3c] sm:$0xf]
        %v1682 = vld [vmem:[%s4] sm:$0x1]
        %v1684 = vlaneseq
        %v1685 = vshrl.u32 %v1684, 7
        %v1686 = vsub.s32 0, %v1685
        %v1687 = vrot.slane %v1682, %v1686
        %v1693 = vunpack.c.l.b16 %v1662
        %v1694 = vunpack.c.l.b16 %v1663
        %v1695 = vunpack.c.l.b16 %v1664
        %v1696 = vunpack.c.l.b16 %v1665
        %v1697 = vpack.c.b16 %v1694, %v1693
        %v1698 = vpack.c.b16 %v1696, %v1695
        %v1717 = vunpack.c.l.b16 %v1666
        %v1718 = vunpack.c.l.b16 %v1667
        %v1719 = vunpack.c.l.b16 %v1668
        %v1720 = vunpack.c.l.b16 %v1669
        %v1721 = vunpack.c.l.b16 %v1670
        %v1722 = vunpack.c.l.b16 %v1671
        %v1723 = vunpack.c.l.b16 %v1672
        %v1724 = vunpack.c.l.b16 %v1673
        %v1725 = vunpack.c.l.b16 %v1674
        %v1726 = vunpack.c.l.b16 %v1675
        %v1727 = vunpack.c.l.b16 %v1676
        %v1728 = vunpack.c.l.b16 %v1677
        %v1729 = vunpack.c.l.b16 %v1678
        %v1730 = vunpack.c.l.b16 %v1679
        %v1731 = vunpack.c.l.b16 %v1680
        %v1732 = vunpack.c.l.b16 %v1681
        %v1733 = vpack.c.b16 %v1718, %v1717
        %v1734 = vpack.c.b16 %v1720, %v1719
        %v1735 = vpack.c.b16 %v1722, %v1721
        %v1736 = vpack.c.b16 %v1724, %v1723
        %v1737 = vpack.c.b16 %v1726, %v1725
        %v1738 = vpack.c.b16 %v1728, %v1727
        %v1739 = vpack.c.b16 %v1730, %v1729
        %v1740 = vpack.c.b16 %v1732, %v1731
        %1749 = vmatprep.subr.bf16.mxu0 0
        %1750 = vmatpush1.bf16.msra.mxu0 %v1740
        %1751 = vmatprep.subr.bf16.mxu0 0
        %1752 = vmatpush1.bf16.msra.mxu0 %v1739
        %1753 = vmatprep.subr.bf16.mxu0 0
        %1754 = vmatpush1.bf16.msra.mxu0 %v1738
        %1755 = vmatprep.subr.bf16.mxu0 0
        %1756 = vmatpush1.bf16.msra.mxu0 %v1737
        %1757 = vmatprep.subr.bf16.mxu0 0
        %1758 = vmatpush1.bf16.msra.mxu0 %v1736
        %1759 = vmatprep.subr.bf16.mxu0 0
        %1760 = vmatpush1.bf16.msra.mxu0 %v1735
        %1761 = vmatprep.subr.bf16.mxu0 0
        %1762 = vmatpush1.bf16.msra.mxu0 %v1734
        %1763 = vmatprep.subr.bf16.mxu0 0
        %1764 = vmatpush1.bf16.msra.mxu0 %v1733
        %1765 = vmatprep.subr.bf16.mxu0 0
        %1766 = vmatpush2.bf16.msra.mxu0 0
        %1767 = vmatprep.subr.bf16.mxu0 0
        %1768 = vmatpush2.bf16.msra.mxu0 0
        %1769 = vmatprep.subr.bf16.mxu0 0
        %1770 = vmatpush2.bf16.msra.mxu0 0
        %1771 = vmatprep.subr.bf16.mxu0 0
        %1772 = vmatpush2.bf16.msra.mxu0 0
        %1773 = vmatprep.subr.bf16.mxu0 0
        %1774 = vmatpush2.bf16.msra.mxu0 0
        %1775 = vmatprep.subr.bf16.mxu0 0
        %1776 = vmatpush2.bf16.msra.mxu0 0
        %1777 = vmatprep.subr.bf16.mxu0 0
        %1778 = vmatpush2.bf16.msra.mxu0 0
        %1779 = vmatprep.subr.bf16.mxu0 0
        %1780 = vmatpush2.bf16.msra.mxu0 0
        %1781 = vmatprep.mubr.bf16.mxu0 0
        %1782 = vmatmul.mubr.bf16.gmra.mxu0 %v1697
        %v1783 = vpop.f32.mrf.mxu0
        %v1784 = vadd.f32 %v1687, %v1783
        %v1785 = vpop.f32.mrf.mxu0
        %v1786 = vpop.f32.mrf.mxu0
        %v1787 = vadd.f32 %v1687, %v1786
        %v1788 = vpop.f32.mrf.mxu0
        %1789 = vmatprep.mubr.bf16.mxu0 0
        %1790 = vmatmul.mubr.bf16.gmra.mxu0 %v1698
        %v1791 = vpop.f32.mrf.mxu0
        %v1792 = vadd.f32 %v1687, %v1791
        %v1793 = vpop.f32.mrf.mxu0
        %v1794 = vpop.f32.mrf.mxu0
        %v1795 = vadd.f32 %v1687, %v1794
        %v1796 = vpop.f32.mrf.mxu0
        %1797 = vdwg.mxu0
        %v1798 = vpack.c.bf16 %v1787, %v1784
        %v1799 = vpack.c.bf16 %v1795, %v1792
        %v1802 = vunpack.c.l.b16 %v1798
        %v1803 = vunpack.c.h.b16 %v1798
        %v1804 = vunpack.c.l.b16 %v1799
        %v1805 = vunpack.c.h.b16 %v1799
        %v1806 = vpack.c.b16 %v1802, %v1802
        %v1807 = vpack.c.b16 %v1803, %v1803
        %v1808 = vpack.c.b16 %v1804, %v1804
        %v1809 = vpack.c.b16 %v1805, %v1805
        %1814 = vst [vmem:[%s271] sm:$0xf] %v1806
        %1815 = vst [vmem:[%s271 + $0x4] sm:$0xf] %v1807
        %1816 = vst [vmem:[%s271 + $0x8] sm:$0xf] %v1808
        %1817 = vst [vmem:[%s271 + $0xc] sm:$0xf] %v1809
        %s1818 = sand.u32 %s141, 1
        %s1819 = scalar_lea.sflag [#allocation5], %s1818
        %s1820 = sand.u32 %s141, 1
        %s1821 = smul.addr %s1820, 16
        %s1822 = scalar_lea.vmem [#allocation9], %s1821
        // Predicated region
        $region53: #{tpu_custom_call.1} parent=39 // pred_check
          %p1823 = pneg %p151
        $region54: #{tpu_custom_call.1} parent=39 // pred_check_branch
          %1825 = sbr.rel (%p1823) target = $region56
        $region55: #{tpu_custom_call.1} parent=39 // pred_region
          %s1826 = smul.u32 4, %s23
          %s1828 = ssub.s32 256, 256
          %1829 = vsyncadd %s1819, %s1828
          %s1830 = smul.addr %s1826, 64
          %s1831 = scalar_lea.hbm %s5, %s1830
          %s1832 = sshll.u32 %s1822, 4
          %s1833 = int_to_ptr.vmem [resolvable:$true] %s1832
          %1838 = dma.vmem_to_hbm [thread:$0]  %s1833, 256, %s1831, %s1819, 64, 64, 4
        $region56: #{tpu_custom_call.1} parent=39 // pred_fallthru
          _
      $region40: #{tpu_custom_call.1} parent=5 // pred_fallthru
        _
      %p1839 = scmp.le.s32.totalorder 2, %s18
      // Predicated region
      $region57: #{tpu_custom_call.1} parent=5 // pred_check
        %p1840 = pneg %p1839
      $region58: #{tpu_custom_call.1} parent=5 // pred_check_branch
        %1842 = sbr.rel (%p1840) target = $region60
      $region59: #{tpu_custom_call.1} parent=5 // pred_region
        %s1843 = ssub.s32 %s18, 2
        // Predicated region
        $region61: #{tpu_custom_call.1} parent=59 // pred_check
          %p1844 = pneg %p157
        $region62: #{tpu_custom_call.1} parent=59 // pred_check_branch
          %1846 = sbr.rel (%p1844) target = $region64
        $region63: #{tpu_custom_call.1} parent=59 // pred_region
          %s1847 = sand.u32 %s142, 1
          %s1848 = scalar_lea.sflag [#allocation5], %s1847
          %s1849 = sand.u32 %s142, 1
          %s1850 = smul.addr %s1849, 16
          %s1851 = scalar_lea.vmem [#allocation9], %s1850
          %1852 = dma.done %s1848, 256
        $region64: #{tpu_custom_call.1} parent=59 // pred_fallthru
          _
      $region60: #{tpu_custom_call.1} parent=5 // pred_fallthru
        _
    $region6: #{tpu_custom_call.1} parent=1 // loop_footer
      %s22 = sadd.s32 1, %s18
    $region7: #{tpu_custom_call.1} parent=1 // loop_footer_branch
      %17 = sbr.rel target = $region3
    $region8: #{tpu_custom_call.1} parent=1 // loop_exit
      _
    %1853 = vsyncpa [#allocation4], 1
    %s1854 = scalar_lea.sflag [#allocation4], 1
    %1855 = vsyncpa %s1854, 1
    %1856 = vsyncpa [#allocation7], 1
    %1857 = vsyncpa [#allocation5], 1
    %s1858 = scalar_lea.sflag [#allocation5], 1
    %1859 = vsyncpa %s1858, 1

</llo_original>
